<compile_context>
chip_gen: v7x
topology: tpu7x:2x2x1
jax: 0.10.0
libtpu: 0.0.40
codegen_flags: <defaults>
</compile_context>

<pallas_src>
import functools

import jax
import jax.numpy as jnp
import numpy as np
from jax.experimental import pallas as pl
from jax.experimental.pallas import tpu as pltpu


def _round_up(v: int, m: int) -> int:
    return -(-v // m) * m


def _triu_reduce_matrix(num_fields: int, embed_size: int, p_pad: int) -> np.ndarray:
    """Constant 0/1 matrix mapping per-delta product lanes -> triu row-major columns.

    Row layout (K axis): for d = 1..F-1 (in order), a block of (F-d)*E rows where
    row (i*E + e) corresponds to the product x[:, i, e] * x[:, i+d, e].
    Column c(i, j) is the triu-row-major index of pair (i, j), i < j — identical to
    torch.triu_indices(F, F, 1) ordering.  Values are exactly representable in bf16.
    """
    F, E = num_fields, embed_size
    col = {}
    p = 0
    for i in range(F):
        for j in range(i + 1, F):
            col[(i, j)] = p
            p += 1
    w = np.zeros((p * E, p_pad), dtype=np.float32)
    off = 0
    for d in range(1, F):
        for i in range(F - d):
            w[off + i * E: off + (i + 1) * E, col[(i, i + d)]] = 1.0
        off += (F - d) * E
    return w


def _fm_pairs_kernel(w_ref, x_ref, o_ref, *, num_fields: int, embed_size: int,
                     split_f32: bool):
    """One batch tile.

    w_ref : (P*E, P_pad) constant 0/1 reduce+permute matrix (bf16), resident in VMEM.
    x_ref : (TB, F*E)    lane-dense flattened (field, embed) rows.
    o_ref : (TB, P_pad)  lane-dense triu pair dot-products (padded with zeros).
    """
    F, E = num_fields, embed_size
    xv = x_ref[...]                                    # (TB, F*E) in the input dtype
    acc = jnp.zeros(o_ref.shape, jnp.float32)          # (TB, P_pad) f32 accumulator
    off = 0
    for d in range(1, F):                              # static unroll over deltas
        k = (F - d) * E
        lo = xv[:, :k]                                 # fields 0 .. F-d-1   (aligned)
        hi = xv[:, d * E:]                             # fields d .. F-1     (one lane shift)
        w = w_ref[off:off + k, :]                      # (k, P_pad) static, sublane-aligned
        if split_f32:
            # f32 inputs: keep ~f32 accuracy on the bf16 MXU via a hi/lo split
            # (two bf16 passes, f32 accumulation).
            prod = lo.astype(jnp.float32) * hi.astype(jnp.float32)
            p_hi = prod.astype(jnp.bfloat16)
            p_lo = (prod - p_hi.astype(jnp.float32)).astype(jnp.bfloat16)
            acc = acc + jnp.dot(p_hi, w, preferred_element_type=jnp.float32)
            acc = acc + jnp.dot(p_lo, w, preferred_element_type=jnp.float32)
        else:
            # bf16 (or narrower) inputs: native bf16 multiply, single MXU pass,
            # f32 accumulation from preferred_element_type.
            prod = (lo * hi).astype(jnp.bfloat16)
            acc = acc + jnp.dot(prod, w, preferred_element_type=jnp.float32)
        off += k
    o_ref[...] = acc.astype(o_ref.dtype)


def _vmem_plan(B: int, FE: int, P_pad: int, itemsize: int):
    """Pick (batch tile, vmem_limit_bytes) in a generation-aware way."""
    # Sublane packing: f32 -> 8, bf16 -> 16, int8/fp8 -> 32 rows per sublane tile.
    align = max(8, 32 // max(int(itemsize), 1))
    try:
        phys_vmem = int(pltpu.get_tpu_info().vmem_capacity_bytes)
    except Exception:
        phys_vmem = 64 * 1024 * 1024                    # unknown -> assume smallest (v7x-like)
    small_vmem = phys_vmem <= 64 * 1024 * 1024
    tile_budget = (12 if small_vmem else 20) * 1024 * 1024
    vmem_limit = (48 if small_vmem else 64) * 1024 * 1024

    # Per-row working set: double-buffered in/out tiles + f32/bf16 working slabs
    # (conservative so even pessimistic live ranges stay well under the limit).
    per_row = 2 * (FE + P_pad) * itemsize + 4 * (5 * FE + 2 * P_pad)
    tb = max(align, min(4096, tile_budget // max(per_row, 1)))
    tb -= tb % align

    if B <= 2 * align:
        return B, vmem_limit                            # tiny batch: one full-extent block
    # Keep >= 2 grid steps so both v7x TensorCores get batch tiles (harmless on 1-TC chips).
    tb = min(tb, _round_up(pl.cdiv(B, 2), align))
    return max(align, tb), vmem_limit


def fm_layer(x: jax.Array, *, block_batch: int | None = None) -> jax.Array:
    """Factorization Machine pairwise-interaction layer.

    x : (B, F, E)  ->  y : (B, F*(F-1)//2), same semantics as the PyTorch FMLayer
    (torch.triu_indices(F, F, 1) row-major pair ordering).
    """
    B, F, E = x.shape
    assert F > 1, "FM model requires number of fields > 1"
    P = F * (F - 1) // 2
    P_pad = _round_up(P, 128)                           # lane-dense output slab
    FE = F * E
    itemsize = jnp.dtype(x.dtype).itemsize
    split_f32 = x.dtype == jnp.float32

    # Free view: lane-dense (B, F*E) slab for the input DMA.
    x2 = x.reshape(B, FE)
    # Constant reduce + permute matrix (exact in bf16: entries are 0/1).
    w = jnp.asarray(_triu_reduce_matrix(F, E, P_pad), dtype=jnp.bfloat16)
    K = w.shape[0]                                      # = P * E

    auto_tb, vmem_limit = _vmem_plan(B, FE, P_pad, itemsize)
    TB = block_batch if block_batch is not None else auto_tb
    grid = (pl.cdiv(B, TB),)

    kernel = functools.partial(_fm_pairs_kernel, num_fields=F, embed_size=E,
                               split_f32=split_f32)

    mxu_passes = 2 if split_f32 else 1
    out = pl.pallas_call(
        kernel,
        out_shape=jax.ShapeDtypeStruct((B, P_pad), x.dtype),
        grid_spec=pltpu.PrefetchScalarGridSpec(
            num_scalar_prefetch=0,
            grid=grid,
            in_specs=[
                # Constant matrix: same block every step -> DMA'd once, stays in VMEM.
                pl.BlockSpec((K, P_pad), lambda b: (0, 0)),
                # Batch tile of the flattened input.
                pl.BlockSpec((TB, FE), lambda b: (b, 0)),
            ],
            out_specs=pl.BlockSpec((TB, P_pad), lambda b: (b, 0)),
        ),
        compiler_params=pltpu.CompilerParams(
            dimension_semantics=("parallel",),          # batch tiles independent (megacore)
            vmem_limit_bytes=vmem_limit,
        ),
        cost_estimate=pl.CostEstimate(
            flops=2 * B * P * E * mxu_passes,
            transcendentals=0,
            bytes_accessed=(B * FE + B * P_pad) * itemsize + K * P_pad * 2,
        ),
    )(w, x2)
    # TODO(synk): consumer could keep the padded (B, P_pad) layout to skip this slice.
    return out[:, :P]


def _reference(x) -> np.ndarray:
    x = np.asarray(x, dtype=np.float32)
    B, F, E = x.shape
    inter = np.einsum("bfe,bge->bfg", x, x)
    iu, ju = np.triu_indices(F, k=1)
    return inter[:, iu, ju].reshape(B, -1)


if __name__ == "__main__":
    B, F, E = 32, 8, 32   # batch, num_fields, embed_size (small test shapes)
    P = F * (F - 1) // 2

    # f32 path (hi/lo split on the MXU -> near-f32 accuracy).
    x = jax.random.normal(jax.random.PRNGKey(0), (B, F, E), dtype=jnp.float32)
    y = jax.block_until_ready(fm_layer(x))
    assert y.shape == (B, P), (y.shape, (B, P))
    np.testing.assert_allclose(np.asarray(y), _reference(x), rtol=2e-3, atol=2e-3)

    # Multi-tile path with an uneven (masked) final batch block.
    x_b = jax.random.normal(jax.random.PRNGKey(1), (20, F, E), dtype=jnp.float32)
    y_b = jax.block_until_ready(fm_layer(x_b, block_batch=8))
    assert y_b.shape == (20, P)
    np.testing.assert_allclose(np.asarray(y_b), _reference(x_b), rtol=2e-3, atol=2e-3)

    # bf16 path (single MXU pass, f32 accumulation); tolerance reflects bf16
    # product rounding and bf16 output storage.
    x_h = jax.random.normal(jax.random.PRNGKey(2), (16, F, E), dtype=jnp.bfloat16)
    y_h = jax.block_until_ready(fm_layer(x_h))
    assert y_h.shape == (16, P)
    np.testing.assert_allclose(np.asarray(y_h, dtype=np.float32), _reference(x_h),
                               rtol=5e-2, atol=1e-1)

    print("KERNEL_OK")
</pallas_src>

<mosaic_0001>
module attributes {stable_mosaic.version = 11 : i64} {
  func.func @_fm_pairs_kernel(%arg0: i32, %arg1: memref<896x128xbf16, #tpu.memory_space<vmem>>, %arg2: memref<16x256xf32, #tpu.memory_space<vmem>>, %arg3: memref<16x128xf32, #tpu.memory_space<vmem>>) attributes {dimension_semantics = [#tpu.dimension_semantics<parallel>], iteration_bounds = array<i64: 2>, scalar_prefetch = 0 : i64, scratch_operands = 0 : i64, tpu.core_type = #tpu.core_type<tc>, window_params = [{pipeline_mode = #tpu.pipeline_mode<synchronous>, transform_indices = @transform_0, window_bounds = array<i64: 896, 128>}, {transform_indices = @transform_1, window_bounds = array<i64: 16, 256>}, {transform_indices = @transform_2, window_bounds = array<i64: 16, 128>}]} {
    %c0 = arith.constant 0 : index
    %c0_0 = arith.constant 0 : index
    %0 = vector.load %arg2[%c0, %c0_0] : memref<16x256xf32, #tpu.memory_space<vmem>>, vector<16x256xf32>
    %cst = arith.constant 0.000000e+00 : f32
    %1 = vector.broadcast %cst : f32 to vector<16x128xf32>
    %2 = vector.extract_strided_slice %0 {offsets = [0, 0], sizes = [16, 224], strides = [1, 1]} : vector<16x256xf32> to vector<16x224xf32>
    %3 = vector.extract_strided_slice %0 {offsets = [0, 32], sizes = [16, 224], strides = [1, 1]} : vector<16x256xf32> to vector<16x224xf32>
    %c0_1 = arith.constant 0 : index
    %c0_2 = arith.constant 0 : index
    %4 = vector.load %arg1[%c0_1, %c0_2] : memref<896x128xbf16, #tpu.memory_space<vmem>>, vector<224x128xbf16>
    %5 = arith.mulf %2, %3 : vector<16x224xf32>
    %6 = arith.truncf %5 : vector<16x224xf32> to vector<16x224xbf16>
    %7 = arith.extf %6 : vector<16x224xbf16> to vector<16x224xf32>
    %8 = arith.subf %5, %7 : vector<16x224xf32>
    %9 = arith.truncf %8 : vector<16x224xf32> to vector<16x224xbf16>
    %cst_3 = arith.constant dense<0.000000e+00> : vector<16x128xf32>
    %10 = tpu.matmul %6, %4, %cst_3 {dimension_numbers = #tpu.dot_dimension_numbers<[1], [0], [0], [1], [0, 0, 1, 1], [], []>} : vector<16x224xbf16>, vector<224x128xbf16>, vector<16x128xf32> -> vector<16x128xf32>
    %11 = arith.addf %1, %10 : vector<16x128xf32>
    %cst_4 = arith.constant dense<0.000000e+00> : vector<16x128xf32>
    %12 = tpu.matmul %9, %4, %cst_4 {dimension_numbers = #tpu.dot_dimension_numbers<[1], [0], [0], [1], [0, 0, 1, 1], [], []>} : vector<16x224xbf16>, vector<224x128xbf16>, vector<16x128xf32> -> vector<16x128xf32>
    %13 = arith.addf %11, %12 : vector<16x128xf32>
    %14 = vector.extract_strided_slice %0 {offsets = [0, 0], sizes = [16, 192], strides = [1, 1]} : vector<16x256xf32> to vector<16x192xf32>
    %15 = vector.extract_strided_slice %0 {offsets = [0, 64], sizes = [16, 192], strides = [1, 1]} : vector<16x256xf32> to vector<16x192xf32>
    %c224 = arith.constant 224 : index
    %c0_5 = arith.constant 0 : index
    %16 = vector.load %arg1[%c224, %c0_5] : memref<896x128xbf16, #tpu.memory_space<vmem>>, vector<192x128xbf16>
    %17 = arith.mulf %14, %15 : vector<16x192xf32>
    %18 = arith.truncf %17 : vector<16x192xf32> to vector<16x192xbf16>
    %19 = arith.extf %18 : vector<16x192xbf16> to vector<16x192xf32>
    %20 = arith.subf %17, %19 : vector<16x192xf32>
    %21 = arith.truncf %20 : vector<16x192xf32> to vector<16x192xbf16>
    %cst_6 = arith.constant dense<0.000000e+00> : vector<16x128xf32>
    %22 = tpu.matmul %18, %16, %cst_6 {dimension_numbers = #tpu.dot_dimension_numbers<[1], [0], [0], [1], [0, 0, 1, 1], [], []>} : vector<16x192xbf16>, vector<192x128xbf16>, vector<16x128xf32> -> vector<16x128xf32>
    %23 = arith.addf %13, %22 : vector<16x128xf32>
    %cst_7 = arith.constant dense<0.000000e+00> : vector<16x128xf32>
    %24 = tpu.matmul %21, %16, %cst_7 {dimension_numbers = #tpu.dot_dimension_numbers<[1], [0], [0], [1], [0, 0, 1, 1], [], []>} : vector<16x192xbf16>, vector<192x128xbf16>, vector<16x128xf32> -> vector<16x128xf32>
    %25 = arith.addf %23, %24 : vector<16x128xf32>
    %26 = vector.extract_strided_slice %0 {offsets = [0, 0], sizes = [16, 160], strides = [1, 1]} : vector<16x256xf32> to vector<16x160xf32>
    %27 = vector.extract_strided_slice %0 {offsets = [0, 96], sizes = [16, 160], strides = [1, 1]} : vector<16x256xf32> to vector<16x160xf32>
    %c416 = arith.constant 416 : index
    %c0_8 = arith.constant 0 : index
    %28 = vector.load %arg1[%c416, %c0_8] : memref<896x128xbf16, #tpu.memory_space<vmem>>, vector<160x128xbf16>
    %29 = arith.mulf %26, %27 : vector<16x160xf32>
    %30 = arith.truncf %29 : vector<16x160xf32> to vector<16x160xbf16>
    %31 = arith.extf %30 : vector<16x160xbf16> to vector<16x160xf32>
    %32 = arith.subf %29, %31 : vector<16x160xf32>
    %33 = arith.truncf %32 : vector<16x160xf32> to vector<16x160xbf16>
    %cst_9 = arith.constant dense<0.000000e+00> : vector<16x128xf32>
    %34 = tpu.matmul %30, %28, %cst_9 {dimension_numbers = #tpu.dot_dimension_numbers<[1], [0], [0], [1], [0, 0, 1, 1], [], []>} : vector<16x160xbf16>, vector<160x128xbf16>, vector<16x128xf32> -> vector<16x128xf32>
    %35 = arith.addf %25, %34 : vector<16x128xf32>
    %cst_10 = arith.constant dense<0.000000e+00> : vector<16x128xf32>
    %36 = tpu.matmul %33, %28, %cst_10 {dimension_numbers = #tpu.dot_dimension_numbers<[1], [0], [0], [1], [0, 0, 1, 1], [], []>} : vector<16x160xbf16>, vector<160x128xbf16>, vector<16x128xf32> -> vector<16x128xf32>
    %37 = arith.addf %35, %36 : vector<16x128xf32>
    %38 = vector.extract_strided_slice %0 {offsets = [0, 0], sizes = [16, 128], strides = [1, 1]} : vector<16x256xf32> to vector<16x128xf32>
    %39 = vector.extract_strided_slice %0 {offsets = [0, 128], sizes = [16, 128], strides = [1, 1]} : vector<16x256xf32> to vector<16x128xf32>
    %c576 = arith.constant 576 : index
    %c0_11 = arith.constant 0 : index
    %40 = vector.load %arg1[%c576, %c0_11] : memref<896x128xbf16, #tpu.memory_space<vmem>>, vector<128x128xbf16>
    %41 = arith.mulf %38, %39 : vector<16x128xf32>
    %42 = arith.truncf %41 : vector<16x128xf32> to vector<16x128xbf16>
    %43 = arith.extf %42 : vector<16x128xbf16> to vector<16x128xf32>
    %44 = arith.subf %41, %43 : vector<16x128xf32>
    %45 = arith.truncf %44 : vector<16x128xf32> to vector<16x128xbf16>
    %cst_12 = arith.constant dense<0.000000e+00> : vector<16x128xf32>
    %46 = tpu.matmul %42, %40, %cst_12 {dimension_numbers = #tpu.dot_dimension_numbers<[1], [0], [0], [1], [0, 0, 1, 1], [], []>} : vector<16x128xbf16>, vector<128x128xbf16>, vector<16x128xf32> -> vector<16x128xf32>
    %47 = arith.addf %37, %46 : vector<16x128xf32>
    %cst_13 = arith.constant dense<0.000000e+00> : vector<16x128xf32>
    %48 = tpu.matmul %45, %40, %cst_13 {dimension_numbers = #tpu.dot_dimension_numbers<[1], [0], [0], [1], [0, 0, 1, 1], [], []>} : vector<16x128xbf16>, vector<128x128xbf16>, vector<16x128xf32> -> vector<16x128xf32>
    %49 = arith.addf %47, %48 : vector<16x128xf32>
    %50 = vector.extract_strided_slice %0 {offsets = [0, 0], sizes = [16, 96], strides = [1, 1]} : vector<16x256xf32> to vector<16x96xf32>
    %51 = vector.extract_strided_slice %0 {offsets = [0, 160], sizes = [16, 96], strides = [1, 1]} : vector<16x256xf32> to vector<16x96xf32>
    %c704 = arith.constant 704 : index
    %c0_14 = arith.constant 0 : index
    %52 = vector.load %arg1[%c704, %c0_14] : memref<896x128xbf16, #tpu.memory_space<vmem>>, vector<96x128xbf16>
    %53 = arith.mulf %50, %51 : vector<16x96xf32>
    %54 = arith.truncf %53 : vector<16x96xf32> to vector<16x96xbf16>
    %55 = arith.extf %54 : vector<16x96xbf16> to vector<16x96xf32>
    %56 = arith.subf %53, %55 : vector<16x96xf32>
    %57 = arith.truncf %56 : vector<16x96xf32> to vector<16x96xbf16>
    %cst_15 = arith.constant dense<0.000000e+00> : vector<16x128xf32>
    %58 = tpu.matmul %54, %52, %cst_15 {dimension_numbers = #tpu.dot_dimension_numbers<[1], [0], [0], [1], [0, 0, 1, 1], [], []>} : vector<16x96xbf16>, vector<96x128xbf16>, vector<16x128xf32> -> vector<16x128xf32>
    %59 = arith.addf %49, %58 : vector<16x128xf32>
    %cst_16 = arith.constant dense<0.000000e+00> : vector<16x128xf32>
    %60 = tpu.matmul %57, %52, %cst_16 {dimension_numbers = #tpu.dot_dimension_numbers<[1], [0], [0], [1], [0, 0, 1, 1], [], []>} : vector<16x96xbf16>, vector<96x128xbf16>, vector<16x128xf32> -> vector<16x128xf32>
    %61 = arith.addf %59, %60 : vector<16x128xf32>
    %62 = vector.extract_strided_slice %0 {offsets = [0, 0], sizes = [16, 64], strides = [1, 1]} : vector<16x256xf32> to vector<16x64xf32>
    %63 = vector.extract_strided_slice %0 {offsets = [0, 192], sizes = [16, 64], strides = [1, 1]} : vector<16x256xf32> to vector<16x64xf32>
    %c800 = arith.constant 800 : index
    %c0_17 = arith.constant 0 : index
    %64 = vector.load %arg1[%c800, %c0_17] : memref<896x128xbf16, #tpu.memory_space<vmem>>, vector<64x128xbf16>
    %65 = arith.mulf %62, %63 : vector<16x64xf32>
    %66 = arith.truncf %65 : vector<16x64xf32> to vector<16x64xbf16>
    %67 = arith.extf %66 : vector<16x64xbf16> to vector<16x64xf32>
    %68 = arith.subf %65, %67 : vector<16x64xf32>
    %69 = arith.truncf %68 : vector<16x64xf32> to vector<16x64xbf16>
    %cst_18 = arith.constant dense<0.000000e+00> : vector<16x128xf32>
    %70 = tpu.matmul %66, %64, %cst_18 {dimension_numbers = #tpu.dot_dimension_numbers<[1], [0], [0], [1], [0, 0, 1, 1], [], []>} : vector<16x64xbf16>, vector<64x128xbf16>, vector<16x128xf32> -> vector<16x128xf32>
    %71 = arith.addf %61, %70 : vector<16x128xf32>
    %cst_19 = arith.constant dense<0.000000e+00> : vector<16x128xf32>
    %72 = tpu.matmul %69, %64, %cst_19 {dimension_numbers = #tpu.dot_dimension_numbers<[1], [0], [0], [1], [0, 0, 1, 1], [], []>} : vector<16x64xbf16>, vector<64x128xbf16>, vector<16x128xf32> -> vector<16x128xf32>
    %73 = arith.addf %71, %72 : vector<16x128xf32>
    %74 = vector.extract_strided_slice %0 {offsets = [0, 0], sizes = [16, 32], strides = [1, 1]} : vector<16x256xf32> to vector<16x32xf32>
    %75 = vector.extract_strided_slice %0 {offsets = [0, 224], sizes = [16, 32], strides = [1, 1]} : vector<16x256xf32> to vector<16x32xf32>
    %c864 = arith.constant 864 : index
    %c0_20 = arith.constant 0 : index
    %76 = vector.load %arg1[%c864, %c0_20] : memref<896x128xbf16, #tpu.memory_space<vmem>>, vector<32x128xbf16>
    %77 = arith.mulf %74, %75 : vector<16x32xf32>
    %78 = arith.truncf %77 : vector<16x32xf32> to vector<16x32xbf16>
    %79 = arith.extf %78 : vector<16x32xbf16> to vector<16x32xf32>
    %80 = arith.subf %77, %79 : vector<16x32xf32>
    %81 = arith.truncf %80 : vector<16x32xf32> to vector<16x32xbf16>
    %cst_21 = arith.constant dense<0.000000e+00> : vector<16x128xf32>
    %82 = tpu.matmul %78, %76, %cst_21 {dimension_numbers = #tpu.dot_dimension_numbers<[1], [0], [0], [1], [0, 0, 1, 1], [], []>} : vector<16x32xbf16>, vector<32x128xbf16>, vector<16x128xf32> -> vector<16x128xf32>
    %83 = arith.addf %73, %82 : vector<16x128xf32>
    %cst_22 = arith.constant dense<0.000000e+00> : vector<16x128xf32>
    %84 = tpu.matmul %81, %76, %cst_22 {dimension_numbers = #tpu.dot_dimension_numbers<[1], [0], [0], [1], [0, 0, 1, 1], [], []>} : vector<16x32xbf16>, vector<32x128xbf16>, vector<16x128xf32> -> vector<16x128xf32>
    %85 = arith.addf %83, %84 : vector<16x128xf32>
    %c0_23 = arith.constant 0 : index
    %c0_24 = arith.constant 0 : index
    %86 = vector.load %arg3[%c0_23, %c0_24] : memref<16x128xf32, #tpu.memory_space<vmem>>, vector<16x128xf32>
    tpu.vector_store %arg3[%c0_23, %c0_24], %85 {strides = array<i32>} : memref<16x128xf32, #tpu.memory_space<vmem>>, vector<16x128xf32>,
    return
  }
  func.func @transform_0(%arg0: i32) -> (i32, i32) {
    %c0_i32 = arith.constant 0 : i32
    %c0_i32_0 = arith.constant 0 : i32
    %c0_i32_1 = arith.constant 0 : i32
    return %c0_i32, %c0_i32_0 : i32, i32
  }
  func.func @transform_1(%arg0: i32) -> (i32, i32) {
    %c0_i32 = arith.constant 0 : i32
    %c0_i32_0 = arith.constant 0 : i32
    return %arg0, %c0_i32 : i32, i32
  }
  func.func @transform_2(%arg0: i32) -> (i32, i32) {
    %c0_i32 = arith.constant 0 : i32
    %c0_i32_0 = arith.constant 0 : i32
    return %arg0, %c0_i32 : i32, i32
  }
}

</mosaic_0001>

<llo_original>
// kernel: tpu_custom_call.1
$region0: #{tpu_custom_call.1}
  #allocation0 [shape = 'u32[]', space=smem, size = 0x4, offset = 0x4, fixed_abs, tag = 'smem constant byte address 0x4 - core index']
  #allocation1 [shape = 'u32[144,128]{1,0:T(1,128)}', space=vmem, size = 0x12000, scoped, tag = 'internal scratch']
  %s0 = inlined_call_operand.hbm [shape: bf16[896,128], index: 0, kind: input, shape index: {}]
  %s1 = inlined_call_operand.hbm [shape: f32[32,256], index: 1, kind: input, shape index: {}]
  %s2 = inlined_call_operand.hbm [shape: f32[32,128], index: 2, kind: output, shape index: {}]
  %s3 = sld [smem:[#allocation0]]
  $region49: #{tpu_custom_call.1} parent=0
    _
  %s5 = ssub.s32 1, %s3
  %s6 = scalar_select 0, %s5, %s3
  $region1: #{tpu_custom_call.1} parent=0
    #allocation2 [shape = 'u8[229376]{0}', space=vmem, size = 0x38000, scoped, tag = 'input window, operand 0, single buffered']
    #allocation3 [shape = 's32[2]{0}', space=sflag, size = 0x8, scoped, tag = 'scoped memory for tpu_custom_call.1']
    #allocation4 [shape = 's32[2]{0}', space=sflag, size = 0x8, scoped, tag = 'scoped memory for tpu_custom_call.1']
    #allocation5 [shape = 'u8[32768]{0}', space=vmem, size = 0x8000, scoped, tag = 'input window, operand 1']
    #allocation6 [shape = 's32[2]{0}', space=sflag, size = 0x8, scoped, tag = 'scoped memory for tpu_custom_call.1']
    #allocation7 [shape = 'u8[16384]{0}', space=vmem, size = 0x4000, scoped, tag = 'output window, operand 0']
    %7 = vsyncpa [#allocation3], 0
    %8 = vsyncpa [#allocation6], 0
    %s9 = scalar_lea.sflag [#allocation6], 1
    %10 = vsyncpa %s9, 0
    %11 = vsyncpa [#allocation4], 0
    %s12 = scalar_lea.sflag [#allocation4], 1
    %13 = vsyncpa %s12, 0
    loop: start=0, step=1, limit=4
    $region2: #{tpu_custom_call.1} parent=1 // loop_pre_header
      _
    $region3: #{tpu_custom_call.1} parent=1 // loop_header
      %s15 = sphi 0, %s19
      %p16 = scmp.ge.s32.totalorder %s15, 4
      %s23 = sphi 0, %s23
      %s25 = sphi 0, %s23
      %s26 = sphi 0, %s25
      %s40 = sphi 0, %s26
      %s46 = sphi 0, %s48
      %s49 = sphi 0, %s46
      %s50 = sphi 0, %s49
      %s66 = sphi 0, %s50
      %s72 = sphi 0, %s74
      %s75 = sphi 0, %s72
      %s76 = sphi 0, %s75
      %s92 = sphi 0, %s76
    $region4: #{tpu_custom_call.1} parent=1 // loop_header_branch
      %18 = sbr.rel (%p16) target = $region8
    $region5: #{tpu_custom_call.1} parent=1 // loop_body
      %s20 = ssub.s32 %s15, 1
      %s21 = ssub.s32 %s15, 2
      %s22 = sadd.s32 %s15, 1
      %s24 = sadd.s32 %s23, 1
      %p27 = scmp.eq.s32.totalorder %s15, 1
      %p28 = scmp.ne.s32.totalorder %s23, %s25
      %p29 = scmp.eq.s32.totalorder %s15, 0
      %p30 = por %p28, %p29
      %p31 = scmp.ne.s32.totalorder %s23, %s25
      %p32 = scmp.eq.s32.totalorder %s20, 1
      %p33 = por %p31, %p32
      %p34 = scmp.ne.s32.totalorder %s25, %s26
      %p35 = scmp.eq.s32.totalorder %s20, 0
      %p36 = por %p34, %p35
      %p37 = scmp.ne.s32.totalorder %s25, %s26
      %p38 = scmp.eq.s32.totalorder %s21, 1
      %p39 = por %p37, %p38
      %p41 = scmp.ne.s32.totalorder %s26, %s40
      %p42 = scmp.eq.s32.totalorder %s21, 0
      %p43 = por %p41, %p42
      %s44 = ssub.s32 %s15, %s22
      %p45 = scmp.eq.s32.totalorder %s44, 0
      %s47 = sadd.s32 %s46, 1
      %s48 = scalar_select %p45, %s46, %s47
      %p51 = pneg %p45
      %p52 = scmp.eq.s32.totalorder %s15, 1
      %p53 = por %p51, %p52
      %p54 = scmp.ne.s32.totalorder %s46, %s49
      %p55 = scmp.eq.s32.totalorder %s15, 0
      %p56 = por %p54, %p55
      %p57 = scmp.ne.s32.totalorder %s46, %s49
      %p58 = scmp.eq.s32.totalorder %s20, 1
      %p59 = por %p57, %p58
      %p60 = scmp.ne.s32.totalorder %s49, %s50
      %p61 = scmp.eq.s32.totalorder %s20, 0
      %p62 = por %p60, %p61
      %p63 = scmp.ne.s32.totalorder %s49, %s50
      %p64 = scmp.eq.s32.totalorder %s21, 1
      %p65 = por %p63, %p64
      %p67 = scmp.ne.s32.totalorder %s50, %s66
      %p68 = scmp.eq.s32.totalorder %s21, 0
      %p69 = por %p67, %p68
      %s70 = ssub.s32 %s15, %s22
      %p71 = scmp.eq.s32.totalorder %s70, 0
      %s73 = sadd.s32 %s72, 1
      %s74 = scalar_select %p71, %s72, %s73
      %p77 = pneg %p71
      %p78 = scmp.eq.s32.totalorder %s15, 1
      %p79 = por %p77, %p78
      %p80 = scmp.ne.s32.totalorder %s72, %s75
      %p81 = scmp.eq.s32.totalorder %s15, 0
      %p82 = por %p80, %p81
      %p83 = scmp.ne.s32.totalorder %s72, %s75
      %p84 = scmp.eq.s32.totalorder %s20, 1
      %p85 = por %p83, %p84
      %p86 = scmp.ne.s32.totalorder %s75, %s76
      %p87 = scmp.eq.s32.totalorder %s20, 0
      %p88 = por %p86, %p87
      %p89 = scmp.ne.s32.totalorder %s75, %s76
      %p90 = scmp.eq.s32.totalorder %s21, 1
      %p91 = por %p89, %p90
      %p93 = scmp.ne.s32.totalorder %s76, %s92
      %p94 = scmp.eq.s32.totalorder %s21, 0
      %p95 = por %p93, %p94
      %p96 = scmp.le.s32.totalorder 1, %s15
      %p97 = scmp.lt.s32.totalorder %s15, 3
      %p98 = pnand %p96, %p97
      %p99 = pneg %p98
      // Predicated region
      $region9: #{tpu_custom_call.1} parent=5 // pred_check
        _
      $region10: #{tpu_custom_call.1} parent=5 // pred_check_branch
        %101 = sbr.rel (%p98) target = $region12
      $region11: #{tpu_custom_call.1} parent=5 // pred_region
        %s102 = ssub.s32 %s15, 1
        // Predicated region
        $region13: #{tpu_custom_call.1} parent=11 // pred_check
          %p103 = pneg %p36
        $region14: #{tpu_custom_call.1} parent=11 // pred_check_branch
          %105 = sbr.rel (%p103) target = $region16
        $region15: #{tpu_custom_call.1} parent=11 // pred_region
          %s107 = ssub.s32 7168, 7168
          %108 = vsyncadd [#allocation3], %s107
          %s109 = sshll.u32 [#allocation2], 4
          %s110 = int_to_ptr.vmem [resolvable:$true] %s109
          %115 = dma.hbm_to_vmem [thread:$0]  %s0, 7168, %s110, [#allocation3], 64, 64, 4
        $region16: #{tpu_custom_call.1} parent=11 // pred_fallthru
          _
      $region12: #{tpu_custom_call.1} parent=5 // pred_fallthru
        _
      %p116 = scmp.lt.s32.totalorder %s15, 2
      // Predicated region
      $region17: #{tpu_custom_call.1} parent=5 // pred_check
        %p117 = pneg %p116
      $region18: #{tpu_custom_call.1} parent=5 // pred_check_branch
        %119 = sbr.rel (%p117) target = $region20
      $region19: #{tpu_custom_call.1} parent=5 // pred_region
        // Predicated region
        $region21: #{tpu_custom_call.1} parent=19 // pred_check
          %p120 = pneg %p56
        $region22: #{tpu_custom_call.1} parent=19 // pred_check_branch
          %122 = sbr.rel (%p120) target = $region24
        $region23: #{tpu_custom_call.1} parent=19 // pred_region
          %s123 = sand.u32 %s46, 1
          %s124 = scalar_lea.sflag [#allocation6], %s123
          %s125 = sand.u32 %s46, 1
          %s126 = smul.addr %s125, 32
          %s127 = scalar_lea.vmem [#allocation5], %s126
          %s128 = smul.u32 2, %s15
          %s130 = ssub.s32 512, 512
          %131 = vsyncadd %s124, %s130
          %s132 = smul.addr %s128, 2
          %s133 = smul.addr %s132, 128
          %s134 = scalar_lea.hbm %s1, %s133
          %s135 = sshll.u32 %s127, 4
          %s136 = int_to_ptr.vmem [resolvable:$true] %s135
          %141 = dma.hbm_to_vmem [thread:$0]  %s134, 512, %s136, %s124, 256, 256, 16
        $region24: #{tpu_custom_call.1} parent=19 // pred_fallthru
          _
      $region20: #{tpu_custom_call.1} parent=5 // pred_fallthru
        _
      %p142 = scmp.le.s32.totalorder 1, %s15
      %p143 = scmp.lt.s32.totalorder %s15, 3
      %p144 = pnand %p142, %p143
      %p145 = pneg %p144
      // Predicated region
      $region25: #{tpu_custom_call.1} parent=5 // pred_check
        _
      $region26: #{tpu_custom_call.1} parent=5 // pred_check_branch
        %147 = sbr.rel (%p144) target = $region28
      $region27: #{tpu_custom_call.1} parent=5 // pred_region
        %s148 = ssub.s32 %s15, 1
        // Predicated region
        $region29: #{tpu_custom_call.1} parent=27 // pred_check
          %p149 = pneg %p36
        $region30: #{tpu_custom_call.1} parent=27 // pred_check_branch
          %151 = sbr.rel (%p149) target = $region32
        $region31: #{tpu_custom_call.1} parent=27 // pred_region
          %152 = dma.done [#allocation3], 7168
        $region32: #{tpu_custom_call.1} parent=27 // pred_fallthru
          _
        %s153 = sand.u32 %s49, 1
        %s154 = scalar_lea.sflag [#allocation6], %s153
        %s155 = sand.u32 %s49, 1
        %s156 = smul.addr %s155, 32
        %s157 = scalar_lea.vmem [#allocation5], %s156
        // Predicated region
        $region33: #{tpu_custom_call.1} parent=27 // pred_check
          %p158 = pneg %p62
        $region34: #{tpu_custom_call.1} parent=27 // pred_check_branch
          %160 = sbr.rel (%p158) target = $region36
        $region35: #{tpu_custom_call.1} parent=27 // pred_region
          %161 = dma.done %s154, 512
        $region36: #{tpu_custom_call.1} parent=27 // pred_fallthru
          _
        %p162 = pneg %p36
        %p163 = pneg %p33
        %s164 = sand.u32 %s49, 1
        %s165 = scalar_lea.sflag [#allocation6], %s164
        %s166 = sand.u32 %s49, 1
        %s167 = smul.addr %s166, 32
        %s168 = scalar_lea.vmem [#allocation5], %s167
        %p169 = pneg %p62
        %p170 = pneg %p59
        %p171 = pneg %p88
        %p172 = pneg %p85
        %s173 = sand.u32 %s75, 1
        %s174 = scalar_lea.sflag [#allocation4], %s173
        %s175 = sand.u32 %s75, 1
        %s176 = smul.addr %s175, 16
        %s177 = scalar_lea.vmem [#allocation7], %s176
        %s178 = smul.u32 2, %s20
        %s179 = smul.u32 2, %s20
        %v181 = vld [vmem:[%s157] sm:$0xff]
        %v182 = vld [vmem:[%s157 + $0x8] sm:$0xff]
        %v183 = vld [vmem:[%s157 + $0x10] sm:$0xff]
        %v184 = vld [vmem:[%s157 + $0x18] sm:$0xff]
        %v185 = vld [vmem:[#allocation2] sm:$0xf]
        %v186 = vld [vmem:[#allocation2 + $0x4] sm:$0xf]
        %v187 = vld [vmem:[#allocation2 + $0x8] sm:$0xf]
        %v188 = vld [vmem:[#allocation2 + $0xc] sm:$0xf]
        %v189 = vld [vmem:[#allocation2 + $0x10] sm:$0xf]
        %v190 = vld [vmem:[#allocation2 + $0x14] sm:$0xf]
        %v191 = vld [vmem:[#allocation2 + $0x18] sm:$0xf]
        %v192 = vld [vmem:[#allocation2 + $0x1c] sm:$0xf]
        %v193 = vld [vmem:[#allocation2 + $0x20] sm:$0xf]
        %v194 = vld [vmem:[#allocation2 + $0x24] sm:$0xf]
        %v195 = vld [vmem:[#allocation2 + $0x28] sm:$0xf]
        %v196 = vld [vmem:[#allocation2 + $0x2c] sm:$0xf]
        %v197 = vld [vmem:[#allocation2 + $0x30] sm:$0xf]
        %v198 = vld [vmem:[#allocation2 + $0x34] sm:$0xf]
        %v199 = vld [vmem:[#allocation2 + $0x38] sm:$0xf]
        %v200 = vld [vmem:[#allocation2 + $0x3c] sm:$0xf]
        %v201 = vld [vmem:[#allocation2 + $0x40] sm:$0xf]
        %v202 = vld [vmem:[#allocation2 + $0x44] sm:$0xf]
        %v203 = vld [vmem:[#allocation2 + $0x48] sm:$0xf]
        %v204 = vld [vmem:[#allocation2 + $0x4c] sm:$0xf]
        %v205 = vld [vmem:[#allocation2 + $0x50] sm:$0xf]
        %v206 = vld [vmem:[#allocation2 + $0x54] sm:$0xf]
        %v207 = vld [vmem:[#allocation2 + $0x58] sm:$0xf]
        %v208 = vld [vmem:[#allocation2 + $0x5c] sm:$0xf]
        %v209 = vld [vmem:[#allocation2 + $0x60] sm:$0xf]
        %v210 = vld [vmem:[#allocation2 + $0x64] sm:$0xf]
        %v211 = vld [vmem:[#allocation2 + $0x68] sm:$0xf]
        %v212 = vld [vmem:[#allocation2 + $0x6c] sm:$0xf]
        %217 = vrot.lane.b32.xlu0 %v181, 96
        %v218 = vpop.permute.xlu0 %217
        %219 = vrot.lane.b32.xlu0 %v182, 96
        %v220 = vpop.permute.xlu0 %219
        %221 = vrot.lane.b32.xlu0 %v183, 96
        %v222 = vpop.permute.xlu0 %221
        %223 = vrot.lane.b32.xlu0 %v184, 96
        %v224 = vpop.permute.xlu0 %223
        %vm225 = vcmask 785408
        %v226 = vsel %vm225, %v218, %v220
        %v227 = vsel %vm225, %v222, %v224
        %v232 = vmul.f32 %v181, %v226
        %v233 = vmul.f32 %v182, %v220
        %v234 = vmul.f32 %v183, %v227
        %v235 = vmul.f32 %v184, %v224
        %v236 = vpack.c.bf16 %v234, %v232
        %v237 = vpack.c.bf16 %v235, %v233
        %v238 = vunpack.c.l.bf16 %v236
        %v239 = vunpack.c.l.bf16 %v237
        %v240 = vunpack.c.h.bf16 %v236
        %v241 = vunpack.c.h.bf16 %v237
        %v242 = vsub.f32 %v232, %v238
        %v243 = vsub.f32 %v233, %v239
        %v244 = vsub.f32 %v234, %v240
        %v245 = vsub.f32 %v235, %v241
        %v246 = vpack.c.bf16 %v244, %v242
        %v247 = vpack.c.bf16 %v245, %v243
        %v276 = vunpack.c.l.b16 %v185
        %v277 = vunpack.c.l.b16 %v186
        %v278 = vunpack.c.l.b16 %v187
        %v279 = vunpack.c.l.b16 %v188
        %v280 = vunpack.c.l.b16 %v189
        %v281 = vunpack.c.l.b16 %v190
        %v282 = vunpack.c.l.b16 %v191
        %v283 = vunpack.c.l.b16 %v192
        %v284 = vunpack.c.l.b16 %v193
        %v285 = vunpack.c.l.b16 %v194
        %v286 = vunpack.c.l.b16 %v195
        %v287 = vunpack.c.l.b16 %v196
        %v288 = vunpack.c.l.b16 %v197
        %v289 = vunpack.c.l.b16 %v198
        %v290 = vunpack.c.l.b16 %v199
        %v291 = vunpack.c.l.b16 %v200
        %v292 = vunpack.c.l.b16 %v201
        %v293 = vunpack.c.l.b16 %v202
        %v294 = vunpack.c.l.b16 %v203
        %v295 = vunpack.c.l.b16 %v204
        %v296 = vunpack.c.l.b16 %v205
        %v297 = vunpack.c.l.b16 %v206
        %v298 = vunpack.c.l.b16 %v207
        %v299 = vunpack.c.l.b16 %v208
        %v300 = vunpack.c.l.b16 %v209
        %v301 = vunpack.c.l.b16 %v210
        %v302 = vunpack.c.l.b16 %v211
        %v303 = vunpack.c.l.b16 %v212
        %v304 = vpack.c.b16 %v277, %v276
        %v305 = vpack.c.b16 %v279, %v278
        %v306 = vpack.c.b16 %v281, %v280
        %v307 = vpack.c.b16 %v283, %v282
        %v308 = vpack.c.b16 %v285, %v284
        %v309 = vpack.c.b16 %v287, %v286
        %v310 = vpack.c.b16 %v289, %v288
        %v311 = vpack.c.b16 %v291, %v290
        %v312 = vpack.c.b16 %v293, %v292
        %v313 = vpack.c.b16 %v295, %v294
        %v314 = vpack.c.b16 %v297, %v296
        %v315 = vpack.c.b16 %v299, %v298
        %v316 = vpack.c.b16 %v301, %v300
        %v317 = vpack.c.b16 %v303, %v302
        %v333 = vsel %vm225, %v247, 0
        %335 = vmatprep.subr.bf16.mxu0 0
        %336 = vmatpush1.bf16.msra.mxu0 %v304
        %337 = vmatprep.subr.bf16.mxu0 0
        %338 = vmatpush1.bf16.msra.mxu0 %v305
        %339 = vmatprep.subr.bf16.mxu0 0
        %340 = vmatpush1.bf16.msra.mxu0 %v306
        %341 = vmatprep.subr.bf16.mxu0 0
        %342 = vmatpush1.bf16.msra.mxu0 %v307
        %343 = vmatprep.subr.bf16.mxu0 0
        %344 = vmatpush1.bf16.msra.mxu0 %v308
        %345 = vmatprep.subr.bf16.mxu0 0
        %346 = vmatpush1.bf16.msra.mxu0 %v309
        %347 = vmatprep.subr.bf16.mxu0 0
        %348 = vmatpush1.bf16.msra.mxu0 %v310
        %349 = vmatprep.subr.bf16.mxu0 0
        %350 = vmatpush1.bf16.msra.mxu0 %v311
        %351 = vmatprep.subr.bf16.mxu0 0
        %352 = vmatpush1.bf16.msra.mxu0 %v312
        %353 = vmatprep.subr.bf16.mxu0 0
        %354 = vmatpush1.bf16.msra.mxu0 %v313
        %355 = vmatprep.subr.bf16.mxu0 0
        %356 = vmatpush1.bf16.msra.mxu0 %v314
        %357 = vmatprep.subr.bf16.mxu0 0
        %358 = vmatpush1.bf16.msra.mxu0 %v315
        %359 = vmatprep.subr.bf16.mxu0 0
        %360 = vmatpush1.bf16.msra.mxu0 %v316
        %361 = vmatprep.subr.bf16.mxu0 0
        %362 = vmatpush1.bf16.msra.mxu0 %v317
        %363 = vmatprep.subr.bf16.mxu0 0
        %364 = vmatpush1.bf16.msra.mxu0 0
        %365 = vmatprep.subr.bf16.mxu0 0
        %366 = vmatpush1.bf16.msra.mxu0 0
        %367 = vmatprep.mubr.bf16.mxu0 %v333
        %368 = vmatmul.mubr.bf16.gmra.mrb[0].mxu0 %v246
        %v369 = vpop.f32.mrb[0].mxu0
        %v370 = vadd.f32 0.0, %v369
        %v371 = vpop.f32.mrb[0].mxu0
        %v372 = vpop.f32.mrb[0].mxu0
        %v373 = vadd.f32 0.0, %v372
        %v374 = vpop.f32.mrb[0].mxu0
        %375 = vdwg.mxu0
        %v377 = vsel %vm225, %v237, 0
        %379 = vmatprep.subr.bf16.mxu0 0
        %380 = vmatpush1.bf16.msra.mxu0 %v304
        %381 = vmatprep.subr.bf16.mxu0 0
        %382 = vmatpush1.bf16.msra.mxu0 %v305
        %383 = vmatprep.subr.bf16.mxu0 0
        %384 = vmatpush1.bf16.msra.mxu0 %v306
        %385 = vmatprep.subr.bf16.mxu0 0
        %386 = vmatpush1.bf16.msra.mxu0 %v307
        %387 = vmatprep.subr.bf16.mxu0 0
        %388 = vmatpush1.bf16.msra.mxu0 %v308
        %389 = vmatprep.subr.bf16.mxu0 0
        %390 = vmatpush1.bf16.msra.mxu0 %v309
        %391 = vmatprep.subr.bf16.mxu0 0
        %392 = vmatpush1.bf16.msra.mxu0 %v310
        %393 = vmatprep.subr.bf16.mxu0 0
        %394 = vmatpush1.bf16.msra.mxu0 %v311
        %395 = vmatprep.subr.bf16.mxu0 0
        %396 = vmatpush1.bf16.msra.mxu0 %v312
        %397 = vmatprep.subr.bf16.mxu0 0
        %398 = vmatpush1.bf16.msra.mxu0 %v313
        %399 = vmatprep.subr.bf16.mxu0 0
        %400 = vmatpush1.bf16.msra.mxu0 %v314
        %401 = vmatprep.subr.bf16.mxu0 0
        %402 = vmatpush1.bf16.msra.mxu0 %v315
        %403 = vmatprep.subr.bf16.mxu0 0
        %404 = vmatpush1.bf16.msra.mxu0 %v316
        %405 = vmatprep.subr.bf16.mxu0 0
        %406 = vmatpush1.bf16.msra.mxu0 %v317
        %407 = vmatprep.subr.bf16.mxu0 0
        %408 = vmatpush1.bf16.msra.mxu0 0
        %409 = vmatprep.subr.bf16.mxu0 0
        %410 = vmatpush1.bf16.msra.mxu0 0
        %411 = vmatprep.mubr.bf16.mxu0 %v377
        %412 = vmatmul.mubr.bf16.gmra.mrb[0].mxu0 %v236
        %v413 = vpop.f32.mrb[0].mxu0
        %v414 = vadd.f32 %v370, %v413
        %v415 = vpop.f32.mrb[0].mxu0
        %v416 = vpop.f32.mrb[0].mxu0
        %v417 = vadd.f32 %v373, %v416
        %v418 = vpop.f32.mrb[0].mxu0
        %419 = vdwg.mxu0
        %v420 = vld [vmem:[#allocation2 + $0x70] sm:$0xf]
        %v421 = vld [vmem:[#allocation2 + $0x74] sm:$0xf]
        %v422 = vld [vmem:[#allocation2 + $0x78] sm:$0xf]
        %v423 = vld [vmem:[#allocation2 + $0x7c] sm:$0xf]
        %v424 = vld [vmem:[#allocation2 + $0x80] sm:$0xf]
        %v425 = vld [vmem:[#allocation2 + $0x84] sm:$0xf]
        %v426 = vld [vmem:[#allocation2 + $0x88] sm:$0xf]
        %v427 = vld [vmem:[#allocation2 + $0x8c] sm:$0xf]
        %v428 = vld [vmem:[#allocation2 + $0x90] sm:$0xf]
        %v429 = vld [vmem:[#allocation2 + $0x94] sm:$0xf]
        %v430 = vld [vmem:[#allocation2 + $0x98] sm:$0xf]
        %v431 = vld [vmem:[#allocation2 + $0x9c] sm:$0xf]
        %v432 = vld [vmem:[#allocation2 + $0xa0] sm:$0xf]
        %v433 = vld [vmem:[#allocation2 + $0xa4] sm:$0xf]
        %v434 = vld [vmem:[#allocation2 + $0xa8] sm:$0xf]
        %v435 = vld [vmem:[#allocation2 + $0xac] sm:$0xf]
        %v436 = vld [vmem:[#allocation2 + $0xb0] sm:$0xf]
        %v437 = vld [vmem:[#allocation2 + $0xb4] sm:$0xf]
        %v438 = vld [vmem:[#allocation2 + $0xb8] sm:$0xf]
        %v439 = vld [vmem:[#allocation2 + $0xbc] sm:$0xf]
        %v440 = vld [vmem:[#allocation2 + $0xc0] sm:$0xf]
        %v441 = vld [vmem:[#allocation2 + $0xc4] sm:$0xf]
        %v442 = vld [vmem:[#allocation2 + $0xc8] sm:$0xf]
        %v443 = vld [vmem:[#allocation2 + $0xcc] sm:$0xf]
        %444 = vrot.lane.b32.xlu0 %v181, 64
        %v445 = vpop.permute.xlu0 %444
        %446 = vrot.lane.b32.xlu0 %v182, 64
        %v447 = vpop.permute.xlu0 %446
        %448 = vrot.lane.b32.xlu0 %v183, 64
        %v449 = vpop.permute.xlu0 %448
        %450 = vrot.lane.b32.xlu0 %v184, 64
        %v451 = vpop.permute.xlu0 %450
        %vm452 = vcmask 523264
        %v453 = vsel %vm452, %v445, %v447
        %v454 = vsel %vm452, %v449, %v451
        %v459 = vmul.f32 %v181, %v453
        %v460 = vmul.f32 %v182, %v447
        %v461 = vmul.f32 %v183, %v454
        %v462 = vmul.f32 %v184, %v451
        %v463 = vpack.c.bf16 %v461, %v459
        %v464 = vpack.c.bf16 %v462, %v460
        %v465 = vunpack.c.l.bf16 %v463
        %v466 = vunpack.c.l.bf16 %v464
        %v467 = vunpack.c.h.bf16 %v463
        %v468 = vunpack.c.h.bf16 %v464
        %v469 = vsub.f32 %v459, %v465
        %v470 = vsub.f32 %v460, %v466
        %v471 = vsub.f32 %v461, %v467
        %v472 = vsub.f32 %v462, %v468
        %v473 = vpack.c.bf16 %v471, %v469
        %v474 = vpack.c.bf16 %v472, %v470
        %v499 = vunpack.c.l.b16 %v420
        %v500 = vunpack.c.l.b16 %v421
        %v501 = vunpack.c.l.b16 %v422
        %v502 = vunpack.c.l.b16 %v423
        %v503 = vunpack.c.l.b16 %v424
        %v504 = vunpack.c.l.b16 %v425
        %v505 = vunpack.c.l.b16 %v426
        %v506 = vunpack.c.l.b16 %v427
        %v507 = vunpack.c.l.b16 %v428
        %v508 = vunpack.c.l.b16 %v429
        %v509 = vunpack.c.l.b16 %v430
        %v510 = vunpack.c.l.b16 %v431
        %v511 = vunpack.c.l.b16 %v432
        %v512 = vunpack.c.l.b16 %v433
        %v513 = vunpack.c.l.b16 %v434
        %v514 = vunpack.c.l.b16 %v435
        %v515 = vunpack.c.l.b16 %v436
        %v516 = vunpack.c.l.b16 %v437
        %v517 = vunpack.c.l.b16 %v438
        %v518 = vunpack.c.l.b16 %v439
        %v519 = vunpack.c.l.b16 %v440
        %v520 = vunpack.c.l.b16 %v441
        %v521 = vunpack.c.l.b16 %v442
        %v522 = vunpack.c.l.b16 %v443
        %v523 = vpack.c.b16 %v500, %v499
        %v524 = vpack.c.b16 %v502, %v501
        %v525 = vpack.c.b16 %v504, %v503
        %v526 = vpack.c.b16 %v506, %v505
        %v527 = vpack.c.b16 %v508, %v507
        %v528 = vpack.c.b16 %v510, %v509
        %v529 = vpack.c.b16 %v512, %v511
        %v530 = vpack.c.b16 %v514, %v513
        %v531 = vpack.c.b16 %v516, %v515
        %v532 = vpack.c.b16 %v518, %v517
        %v533 = vpack.c.b16 %v520, %v519
        %v534 = vpack.c.b16 %v522, %v521
        %v548 = vsel %vm452, %v464, 0
        %550 = vmatprep.subr.bf16.mxu0 0
        %551 = vmatpush1.bf16.msra.mxu0 %v523
        %552 = vmatprep.subr.bf16.mxu0 0
        %553 = vmatpush1.bf16.msra.mxu0 %v524
        %554 = vmatprep.subr.bf16.mxu0 0
        %555 = vmatpush1.bf16.msra.mxu0 %v525
        %556 = vmatprep.subr.bf16.mxu0 0
        %557 = vmatpush1.bf16.msra.mxu0 %v526
        %558 = vmatprep.subr.bf16.mxu0 0
        %559 = vmatpush1.bf16.msra.mxu0 %v527
        %560 = vmatprep.subr.bf16.mxu0 0
        %561 = vmatpush1.bf16.msra.mxu0 %v528
        %562 = vmatprep.subr.bf16.mxu0 0
        %563 = vmatpush1.bf16.msra.mxu0 %v529
        %564 = vmatprep.subr.bf16.mxu0 0
        %565 = vmatpush1.bf16.msra.mxu0 %v530
        %566 = vmatprep.subr.bf16.mxu0 0
        %567 = vmatpush1.bf16.msra.mxu0 %v531
        %568 = vmatprep.subr.bf16.mxu0 0
        %569 = vmatpush1.bf16.msra.mxu0 %v532
        %570 = vmatprep.subr.bf16.mxu0 0
        %571 = vmatpush1.bf16.msra.mxu0 %v533
        %572 = vmatprep.subr.bf16.mxu0 0
        %573 = vmatpush1.bf16.msra.mxu0 %v534
        %574 = vmatprep.subr.bf16.mxu0 0
        %575 = vmatpush1.bf16.msra.mxu0 0
        %576 = vmatprep.subr.bf16.mxu0 0
        %577 = vmatpush1.bf16.msra.mxu0 0
        %578 = vmatprep.subr.bf16.mxu0 0
        %579 = vmatpush1.bf16.msra.mxu0 0
        %580 = vmatprep.subr.bf16.mxu0 0
        %581 = vmatpush1.bf16.msra.mxu0 0
        %582 = vmatprep.mubr.bf16.mxu0 %v548
        %583 = vmatmul.mubr.bf16.gmra.mrb[0].mxu0 %v463
        %v584 = vpop.f32.mrb[0].mxu0
        %v585 = vadd.f32 0.0, %v584
        %v586 = vpop.f32.mrb[0].mxu0
        %v587 = vpop.f32.mrb[0].mxu0
        %v588 = vadd.f32 0.0, %v587
        %v589 = vpop.f32.mrb[0].mxu0
        %590 = vdwg.mxu0
        %v591 = vadd.f32 %v414, %v585
        %v592 = vadd.f32 %v417, %v588
        %v594 = vsel %vm452, %v474, 0
        %596 = vmatprep.subr.bf16.mxu0 0
        %597 = vmatpush1.bf16.msra.mxu0 %v523
        %598 = vmatprep.subr.bf16.mxu0 0
        %599 = vmatpush1.bf16.msra.mxu0 %v524
        %600 = vmatprep.subr.bf16.mxu0 0
        %601 = vmatpush1.bf16.msra.mxu0 %v525
        %602 = vmatprep.subr.bf16.mxu0 0
        %603 = vmatpush1.bf16.msra.mxu0 %v526
        %604 = vmatprep.subr.bf16.mxu0 0
        %605 = vmatpush1.bf16.msra.mxu0 %v527
        %606 = vmatprep.subr.bf16.mxu0 0
        %607 = vmatpush1.bf16.msra.mxu0 %v528
        %608 = vmatprep.subr.bf16.mxu0 0
        %609 = vmatpush1.bf16.msra.mxu0 %v529
        %610 = vmatprep.subr.bf16.mxu0 0
        %611 = vmatpush1.bf16.msra.mxu0 %v530
        %612 = vmatprep.subr.bf16.mxu0 0
        %613 = vmatpush1.bf16.msra.mxu0 %v531
        %614 = vmatprep.subr.bf16.mxu0 0
        %615 = vmatpush1.bf16.msra.mxu0 %v532
        %616 = vmatprep.subr.bf16.mxu0 0
        %617 = vmatpush1.bf16.msra.mxu0 %v533
        %618 = vmatprep.subr.bf16.mxu0 0
        %619 = vmatpush1.bf16.msra.mxu0 %v534
        %620 = vmatprep.subr.bf16.mxu0 0
        %621 = vmatpush1.bf16.msra.mxu0 0
        %622 = vmatprep.subr.bf16.mxu0 0
        %623 = vmatpush1.bf16.msra.mxu0 0
        %624 = vmatprep.subr.bf16.mxu0 0
        %625 = vmatpush1.bf16.msra.mxu0 0
        %626 = vmatprep.subr.bf16.mxu0 0
        %627 = vmatpush1.bf16.msra.mxu0 0
        %628 = vmatprep.mubr.bf16.mxu0 %v594
        %629 = vmatmul.mubr.bf16.gmra.mrb[0].mxu0 %v473
        %v630 = vpop.f32.mrb[0].mxu0
        %v631 = vadd.f32 0.0, %v630
        %v632 = vpop.f32.mrb[0].mxu0
        %v633 = vpop.f32.mrb[0].mxu0
        %v634 = vadd.f32 0.0, %v633
        %v635 = vpop.f32.mrb[0].mxu0
        %636 = vdwg.mxu0
        %v637 = vadd.f32 %v591, %v631
        %v638 = vadd.f32 %v592, %v634
        %v639 = vld [vmem:[#allocation2 + $0xd0] sm:$0xf]
        %v640 = vld [vmem:[#allocation2 + $0xd4] sm:$0xf]
        %v641 = vld [vmem:[#allocation2 + $0xd8] sm:$0xf]
        %v642 = vld [vmem:[#allocation2 + $0xdc] sm:$0xf]
        %v643 = vld [vmem:[#allocation2 + $0xe0] sm:$0xf]
        %v644 = vld [vmem:[#allocation2 + $0xe4] sm:$0xf]
        %v645 = vld [vmem:[#allocation2 + $0xe8] sm:$0xf]
        %v646 = vld [vmem:[#allocation2 + $0xec] sm:$0xf]
        %v647 = vld [vmem:[#allocation2 + $0xf0] sm:$0xf]
        %v648 = vld [vmem:[#allocation2 + $0xf4] sm:$0xf]
        %v649 = vld [vmem:[#allocation2 + $0xf8] sm:$0xf]
        %v650 = vld [vmem:[#allocation2 + $0xfc] sm:$0xf]
        %v651 = vld [vmem:[#allocation2 + $0x100] sm:$0xf]
        %v652 = vld [vmem:[#allocation2 + $0x104] sm:$0xf]
        %v653 = vld [vmem:[#allocation2 + $0x108] sm:$0xf]
        %v654 = vld [vmem:[#allocation2 + $0x10c] sm:$0xf]
        %v655 = vld [vmem:[#allocation2 + $0x110] sm:$0xf]
        %v656 = vld [vmem:[#allocation2 + $0x114] sm:$0xf]
        %v657 = vld [vmem:[#allocation2 + $0x118] sm:$0xf]
        %v658 = vld [vmem:[#allocation2 + $0x11c] sm:$0xf]
        %659 = vrot.lane.b32.xlu0 %v181, 32
        %v660 = vpop.permute.xlu0 %659
        %661 = vrot.lane.b32.xlu0 %v182, 32
        %v662 = vpop.permute.xlu0 %661
        %663 = vrot.lane.b32.xlu0 %v183, 32
        %v664 = vpop.permute.xlu0 %663
        %665 = vrot.lane.b32.xlu0 %v184, 32
        %v666 = vpop.permute.xlu0 %665
        %vm667 = vcmask 261120
        %v668 = vsel %vm667, %v660, %v662
        %v669 = vsel %vm667, %v664, %v666
        %v674 = vmul.f32 %v181, %v668
        %v675 = vmul.f32 %v182, %v662
        %v676 = vmul.f32 %v183, %v669
        %v677 = vmul.f32 %v184, %v666
        %v678 = vpack.c.bf16 %v676, %v674
        %v679 = vpack.c.bf16 %v677, %v675
        %v680 = vunpack.c.l.bf16 %v678
        %v681 = vunpack.c.l.bf16 %v679
        %v682 = vunpack.c.h.bf16 %v678
        %v683 = vunpack.c.h.bf16 %v679
        %v684 = vsub.f32 %v674, %v680
        %v685 = vsub.f32 %v675, %v681
        %v686 = vsub.f32 %v676, %v682
        %v687 = vsub.f32 %v677, %v683
        %v688 = vpack.c.bf16 %v686, %v684
        %v689 = vpack.c.bf16 %v687, %v685
        %v710 = vunpack.c.l.b16 %v639
        %v711 = vunpack.c.l.b16 %v640
        %v712 = vunpack.c.l.b16 %v641
        %v713 = vunpack.c.l.b16 %v642
        %v714 = vunpack.c.l.b16 %v643
        %v715 = vunpack.c.l.b16 %v644
        %v716 = vunpack.c.l.b16 %v645
        %v717 = vunpack.c.l.b16 %v646
        %v718 = vunpack.c.l.b16 %v647
        %v719 = vunpack.c.l.b16 %v648
        %v720 = vunpack.c.l.b16 %v649
        %v721 = vunpack.c.l.b16 %v650
        %v722 = vunpack.c.l.b16 %v651
        %v723 = vunpack.c.l.b16 %v652
        %v724 = vunpack.c.l.b16 %v653
        %v725 = vunpack.c.l.b16 %v654
        %v726 = vunpack.c.l.b16 %v655
        %v727 = vunpack.c.l.b16 %v656
        %v728 = vunpack.c.l.b16 %v657
        %v729 = vunpack.c.l.b16 %v658
        %v730 = vpack.c.b16 %v711, %v710
        %v731 = vpack.c.b16 %v713, %v712
        %v732 = vpack.c.b16 %v715, %v714
        %v733 = vpack.c.b16 %v717, %v716
        %v734 = vpack.c.b16 %v719, %v718
        %v735 = vpack.c.b16 %v721, %v720
        %v736 = vpack.c.b16 %v723, %v722
        %v737 = vpack.c.b16 %v725, %v724
        %v738 = vpack.c.b16 %v727, %v726
        %v739 = vpack.c.b16 %v729, %v728
        %v751 = vsel %vm667, %v679, 0
        %753 = vmatprep.subr.bf16.mxu0 0
        %754 = vmatpush1.bf16.msra.mxu0 %v730
        %755 = vmatprep.subr.bf16.mxu0 0
        %756 = vmatpush1.bf16.msra.mxu0 %v731
        %757 = vmatprep.subr.bf16.mxu0 0
        %758 = vmatpush1.bf16.msra.mxu0 %v732
        %759 = vmatprep.subr.bf16.mxu0 0
        %760 = vmatpush1.bf16.msra.mxu0 %v733
        %761 = vmatprep.subr.bf16.mxu0 0
        %762 = vmatpush1.bf16.msra.mxu0 %v734
        %763 = vmatprep.subr.bf16.mxu0 0
        %764 = vmatpush1.bf16.msra.mxu0 %v735
        %765 = vmatprep.subr.bf16.mxu0 0
        %766 = vmatpush1.bf16.msra.mxu0 %v736
        %767 = vmatprep.subr.bf16.mxu0 0
        %768 = vmatpush1.bf16.msra.mxu0 %v737
        %769 = vmatprep.subr.bf16.mxu0 0
        %770 = vmatpush1.bf16.msra.mxu0 %v738
        %771 = vmatprep.subr.bf16.mxu0 0
        %772 = vmatpush1.bf16.msra.mxu0 %v739
        %773 = vmatprep.subr.bf16.mxu0 0
        %774 = vmatpush1.bf16.msra.mxu0 0
        %775 = vmatprep.subr.bf16.mxu0 0
        %776 = vmatpush1.bf16.msra.mxu0 0
        %777 = vmatprep.subr.bf16.mxu0 0
        %778 = vmatpush1.bf16.msra.mxu0 0
        %779 = vmatprep.subr.bf16.mxu0 0
        %780 = vmatpush1.bf16.msra.mxu0 0
        %781 = vmatprep.subr.bf16.mxu0 0
        %782 = vmatpush1.bf16.msra.mxu0 0
        %783 = vmatprep.subr.bf16.mxu0 0
        %784 = vmatpush1.bf16.msra.mxu0 0
        %785 = vmatprep.mubr.bf16.mxu0 %v751
        %786 = vmatmul.mubr.bf16.gmra.mrb[0].mxu0 %v678
        %v787 = vpop.f32.mrb[0].mxu0
        %v788 = vadd.f32 0.0, %v787
        %v789 = vpop.f32.mrb[0].mxu0
        %v790 = vpop.f32.mrb[0].mxu0
        %v791 = vadd.f32 0.0, %v790
        %v792 = vpop.f32.mrb[0].mxu0
        %793 = vdwg.mxu0
        %v794 = vadd.f32 %v637, %v788
        %v795 = vadd.f32 %v638, %v791
        %v797 = vsel %vm667, %v689, 0
        %799 = vmatprep.subr.bf16.mxu0 0
        %800 = vmatpush1.bf16.msra.mxu0 %v730
        %801 = vmatprep.subr.bf16.mxu0 0
        %802 = vmatpush1.bf16.msra.mxu0 %v731
        %803 = vmatprep.subr.bf16.mxu0 0
        %804 = vmatpush1.bf16.msra.mxu0 %v732
        %805 = vmatprep.subr.bf16.mxu0 0
        %806 = vmatpush1.bf16.msra.mxu0 %v733
        %807 = vmatprep.subr.bf16.mxu0 0
        %808 = vmatpush1.bf16.msra.mxu0 %v734
        %809 = vmatprep.subr.bf16.mxu0 0
        %810 = vmatpush1.bf16.msra.mxu0 %v735
        %811 = vmatprep.subr.bf16.mxu0 0
        %812 = vmatpush1.bf16.msra.mxu0 %v736
        %813 = vmatprep.subr.bf16.mxu0 0
        %814 = vmatpush1.bf16.msra.mxu0 %v737
        %815 = vmatprep.subr.bf16.mxu0 0
        %816 = vmatpush1.bf16.msra.mxu0 %v738
        %817 = vmatprep.subr.bf16.mxu0 0
        %818 = vmatpush1.bf16.msra.mxu0 %v739
        %819 = vmatprep.subr.bf16.mxu0 0
        %820 = vmatpush1.bf16.msra.mxu0 0
        %821 = vmatprep.subr.bf16.mxu0 0
        %822 = vmatpush1.bf16.msra.mxu0 0
        %823 = vmatprep.subr.bf16.mxu0 0
        %824 = vmatpush1.bf16.msra.mxu0 0
        %825 = vmatprep.subr.bf16.mxu0 0
        %826 = vmatpush1.bf16.msra.mxu0 0
        %827 = vmatprep.subr.bf16.mxu0 0
        %828 = vmatpush1.bf16.msra.mxu0 0
        %829 = vmatprep.subr.bf16.mxu0 0
        %830 = vmatpush1.bf16.msra.mxu0 0
        %831 = vmatprep.mubr.bf16.mxu0 %v797
        %832 = vmatmul.mubr.bf16.gmra.mrb[0].mxu0 %v688
        %v833 = vpop.f32.mrb[0].mxu0
        %v834 = vadd.f32 0.0, %v833
        %v835 = vpop.f32.mrb[0].mxu0
        %v836 = vpop.f32.mrb[0].mxu0
        %v837 = vadd.f32 0.0, %v836
        %v838 = vpop.f32.mrb[0].mxu0
        %839 = vdwg.mxu0
        %v840 = vadd.f32 %v794, %v834
        %v841 = vadd.f32 %v795, %v837
        %v842 = vld [vmem:[#allocation2 + $0x120] sm:$0xf]
        %v843 = vld [vmem:[#allocation2 + $0x124] sm:$0xf]
        %v844 = vld [vmem:[#allocation2 + $0x128] sm:$0xf]
        %v845 = vld [vmem:[#allocation2 + $0x12c] sm:$0xf]
        %v846 = vld [vmem:[#allocation2 + $0x130] sm:$0xf]
        %v847 = vld [vmem:[#allocation2 + $0x134] sm:$0xf]
        %v848 = vld [vmem:[#allocation2 + $0x138] sm:$0xf]
        %v849 = vld [vmem:[#allocation2 + $0x13c] sm:$0xf]
        %v850 = vld [vmem:[#allocation2 + $0x140] sm:$0xf]
        %v851 = vld [vmem:[#allocation2 + $0x144] sm:$0xf]
        %v852 = vld [vmem:[#allocation2 + $0x148] sm:$0xf]
        %v853 = vld [vmem:[#allocation2 + $0x14c] sm:$0xf]
        %v854 = vld [vmem:[#allocation2 + $0x150] sm:$0xf]
        %v855 = vld [vmem:[#allocation2 + $0x154] sm:$0xf]
        %v856 = vld [vmem:[#allocation2 + $0x158] sm:$0xf]
        %v857 = vld [vmem:[#allocation2 + $0x15c] sm:$0xf]
        %v858 = vmul.f32 %v181, %v182
        %v859 = vmul.f32 %v183, %v184
        %v860 = vpack.c.bf16 %v859, %v858
        %v861 = vunpack.c.l.bf16 %v860
        %v862 = vunpack.c.h.bf16 %v860
        %v863 = vsub.f32 %v858, %v861
        %v864 = vsub.f32 %v859, %v862
        %v865 = vpack.c.bf16 %v864, %v863
        %v882 = vunpack.c.l.b16 %v842
        %v883 = vunpack.c.l.b16 %v843
        %v884 = vunpack.c.l.b16 %v844
        %v885 = vunpack.c.l.b16 %v845
        %v886 = vunpack.c.l.b16 %v846
        %v887 = vunpack.c.l.b16 %v847
        %v888 = vunpack.c.l.b16 %v848
        %v889 = vunpack.c.l.b16 %v849
        %v890 = vunpack.c.l.b16 %v850
        %v891 = vunpack.c.l.b16 %v851
        %v892 = vunpack.c.l.b16 %v852
        %v893 = vunpack.c.l.b16 %v853
        %v894 = vunpack.c.l.b16 %v854
        %v895 = vunpack.c.l.b16 %v855
        %v896 = vunpack.c.l.b16 %v856
        %v897 = vunpack.c.l.b16 %v857
        %v898 = vpack.c.b16 %v883, %v882
        %v899 = vpack.c.b16 %v885, %v884
        %v900 = vpack.c.b16 %v887, %v886
        %v901 = vpack.c.b16 %v889, %v888
        %v902 = vpack.c.b16 %v891, %v890
        %v903 = vpack.c.b16 %v893, %v892
        %v904 = vpack.c.b16 %v895, %v894
        %v905 = vpack.c.b16 %v897, %v896
        %914 = vmatprep.subr.bf16.mxu0 0
        %915 = vmatpush1.bf16.msra.mxu0 %v898
        %916 = vmatprep.subr.bf16.mxu0 0
        %917 = vmatpush1.bf16.msra.mxu0 %v899
        %918 = vmatprep.subr.bf16.mxu0 0
        %919 = vmatpush1.bf16.msra.mxu0 %v900
        %920 = vmatprep.subr.bf16.mxu0 0
        %921 = vmatpush1.bf16.msra.mxu0 %v901
        %922 = vmatprep.subr.bf16.mxu0 0
        %923 = vmatpush1.bf16.msra.mxu0 %v902
        %924 = vmatprep.subr.bf16.mxu0 0
        %925 = vmatpush1.bf16.msra.mxu0 %v903
        %926 = vmatprep.subr.bf16.mxu0 0
        %927 = vmatpush1.bf16.msra.mxu0 %v904
        %928 = vmatprep.subr.bf16.mxu0 0
        %929 = vmatpush1.bf16.msra.mxu0 %v905
        %930 = vmatprep.subr.bf16.mxu0 0
        %931 = vmatpush1.bf16.msra.mxu0 0
        %932 = vmatprep.subr.bf16.mxu0 0
        %933 = vmatpush1.bf16.msra.mxu0 0
        %934 = vmatprep.subr.bf16.mxu0 0
        %935 = vmatpush1.bf16.msra.mxu0 0
        %936 = vmatprep.subr.bf16.mxu0 0
        %937 = vmatpush1.bf16.msra.mxu0 0
        %938 = vmatprep.subr.bf16.mxu0 0
        %939 = vmatpush1.bf16.msra.mxu0 0
        %940 = vmatprep.subr.bf16.mxu0 0
        %941 = vmatpush1.bf16.msra.mxu0 0
        %942 = vmatprep.subr.bf16.mxu0 0
        %943 = vmatpush1.bf16.msra.mxu0 0
        %944 = vmatprep.subr.bf16.mxu0 0
        %945 = vmatpush1.bf16.msra.mxu0 0
        %946 = vmatprep.mubr.bf16.mxu0 0
        %947 = vmatmul.mubr.bf16.gmra.mrb[0].mxu0 %v860
        %v948 = vpop.f32.mrb[0].mxu0
        %v949 = vadd.f32 0.0, %v948
        %v950 = vpop.f32.mrb[0].mxu0
        %v951 = vpop.f32.mrb[0].mxu0
        %v952 = vadd.f32 0.0, %v951
        %v953 = vpop.f32.mrb[0].mxu0
        %954 = vdwg.mxu0
        %v955 = vadd.f32 %v840, %v949
        %v956 = vadd.f32 %v841, %v952
        %957 = vmatprep.subr.bf16.mxu0 0
        %958 = vmatpush1.bf16.msra.mxu0 %v898
        %959 = vmatprep.subr.bf16.mxu0 0
        %960 = vmatpush1.bf16.msra.mxu0 %v899
        %961 = vmatprep.subr.bf16.mxu0 0
        %962 = vmatpush1.bf16.msra.mxu0 %v900
        %963 = vmatprep.subr.bf16.mxu0 0
        %964 = vmatpush1.bf16.msra.mxu0 %v901
        %965 = vmatprep.subr.bf16.mxu0 0
        %966 = vmatpush1.bf16.msra.mxu0 %v902
        %967 = vmatprep.subr.bf16.mxu0 0
        %968 = vmatpush1.bf16.msra.mxu0 %v903
        %969 = vmatprep.subr.bf16.mxu0 0
        %970 = vmatpush1.bf16.msra.mxu0 %v904
        %971 = vmatprep.subr.bf16.mxu0 0
        %972 = vmatpush1.bf16.msra.mxu0 %v905
        %973 = vmatprep.subr.bf16.mxu0 0
        %974 = vmatpush1.bf16.msra.mxu0 0
        %975 = vmatprep.subr.bf16.mxu0 0
        %976 = vmatpush1.bf16.msra.mxu0 0
        %977 = vmatprep.subr.bf16.mxu0 0
        %978 = vmatpush1.bf16.msra.mxu0 0
        %979 = vmatprep.subr.bf16.mxu0 0
        %980 = vmatpush1.bf16.msra.mxu0 0
        %981 = vmatprep.subr.bf16.mxu0 0
        %982 = vmatpush1.bf16.msra.mxu0 0
        %983 = vmatprep.subr.bf16.mxu0 0
        %984 = vmatpush1.bf16.msra.mxu0 0
        %985 = vmatprep.subr.bf16.mxu0 0
        %986 = vmatpush1.bf16.msra.mxu0 0
        %987 = vmatprep.subr.bf16.mxu0 0
        %988 = vmatpush1.bf16.msra.mxu0 0
        %989 = vmatprep.mubr.bf16.mxu0 0
        %990 = vmatmul.mubr.bf16.gmra.mrb[0].mxu0 %v865
        %v991 = vpop.f32.mrb[0].mxu0
        %v992 = vadd.f32 0.0, %v991
        %v993 = vpop.f32.mrb[0].mxu0
        %v994 = vpop.f32.mrb[0].mxu0
        %v995 = vadd.f32 0.0, %v994
        %v996 = vpop.f32.mrb[0].mxu0
        %997 = vdwg.mxu0
        %v998 = vadd.f32 %v955, %v992
        %v999 = vadd.f32 %v956, %v995
        %v1000 = vld [vmem:[#allocation2 + $0x160] sm:$0xf]
        %v1001 = vld [vmem:[#allocation2 + $0x164] sm:$0xf]
        %v1002 = vld [vmem:[#allocation2 + $0x168] sm:$0xf]
        %v1003 = vld [vmem:[#allocation2 + $0x16c] sm:$0xf]
        %v1004 = vld [vmem:[#allocation2 + $0x170] sm:$0xf]
        %v1005 = vld [vmem:[#allocation2 + $0x174] sm:$0xf]
        %v1006 = vld [vmem:[#allocation2 + $0x178] sm:$0xf]
        %v1007 = vld [vmem:[#allocation2 + $0x17c] sm:$0xf]
        %v1008 = vld [vmem:[#allocation2 + $0x180] sm:$0xf]
        %v1009 = vld [vmem:[#allocation2 + $0x184] sm:$0xf]
        %v1010 = vld [vmem:[#allocation2 + $0x188] sm:$0xf]
        %v1011 = vld [vmem:[#allocation2 + $0x18c] sm:$0xf]
        %v1012 = vmul.f32 %v181, %v220
        %v1013 = vmul.f32 %v183, %v224
        %v1014 = vpack.c.bf16 %v1013, %v1012
        %v1015 = vunpack.c.l.bf16 %v1014
        %v1016 = vunpack.c.h.bf16 %v1014
        %v1017 = vsub.f32 %v1012, %v1015
        %v1018 = vsub.f32 %v1013, %v1016
        %v1019 = vpack.c.bf16 %v1018, %v1017
        %v1032 = vunpack.c.l.b16 %v1000
        %v1033 = vunpack.c.l.b16 %v1001
        %v1034 = vunpack.c.l.b16 %v1002
        %v1035 = vunpack.c.l.b16 %v1003
        %v1036 = vunpack.c.l.b16 %v1004
        %v1037 = vunpack.c.l.b16 %v1005
        %v1038 = vunpack.c.l.b16 %v1006
        %v1039 = vunpack.c.l.b16 %v1007
        %v1040 = vunpack.c.l.b16 %v1008
        %v1041 = vunpack.c.l.b16 %v1009
        %v1042 = vunpack.c.l.b16 %v1010
        %v1043 = vunpack.c.l.b16 %v1011
        %v1044 = vpack.c.b16 %v1033, %v1032
        %v1045 = vpack.c.b16 %v1035, %v1034
        %v1046 = vpack.c.b16 %v1037, %v1036
        %v1047 = vpack.c.b16 %v1039, %v1038
        %v1048 = vpack.c.b16 %v1041, %v1040
        %v1049 = vpack.c.b16 %v1043, %v1042
        %v1057 = vsel %vm225, %v1014, 0
        %1059 = vmatprep.subr.bf16.mxu0 0
        %1060 = vmatpush1.bf16.msra.mxu0 %v1044
        %1061 = vmatprep.subr.bf16.mxu0 0
        %1062 = vmatpush1.bf16.msra.mxu0 %v1045
        %1063 = vmatprep.subr.bf16.mxu0 0
        %1064 = vmatpush1.bf16.msra.mxu0 %v1046
        %1065 = vmatprep.subr.bf16.mxu0 0
        %1066 = vmatpush1.bf16.msra.mxu0 %v1047
        %1067 = vmatprep.subr.bf16.mxu0 0
        %1068 = vmatpush1.bf16.msra.mxu0 %v1048
        %1069 = vmatprep.subr.bf16.mxu0 0
        %1070 = vmatpush1.bf16.msra.mxu0 %v1049
        %1071 = vmatprep.subr.bf16.mxu0 0
        %1072 = vmatpush1.bf16.msra.mxu0 0
        %1073 = vmatprep.subr.bf16.mxu0 0
        %1074 = vmatpush1.bf16.msra.mxu0 0
        %1075 = vmatprep.subr.bf16.mxu0 0
        %1076 = vmatpush1.bf16.msra.mxu0 0
        %1077 = vmatprep.subr.bf16.mxu0 0
        %1078 = vmatpush1.bf16.msra.mxu0 0
        %1079 = vmatprep.subr.bf16.mxu0 0
        %1080 = vmatpush1.bf16.msra.mxu0 0
        %1081 = vmatprep.subr.bf16.mxu0 0
        %1082 = vmatpush1.bf16.msra.mxu0 0
        %1083 = vmatprep.subr.bf16.mxu0 0
        %1084 = vmatpush1.bf16.msra.mxu0 0
        %1085 = vmatprep.subr.bf16.mxu0 0
        %1086 = vmatpush1.bf16.msra.mxu0 0
        %1087 = vmatprep.subr.bf16.mxu0 0
        %1088 = vmatpush1.bf16.msra.mxu0 0
        %1089 = vmatprep.subr.bf16.mxu0 0
        %1090 = vmatpush1.bf16.msra.mxu0 0
        %1091 = vmatprep.mubr.bf16.mxu0 0
        %1092 = vmatmul.mubr.bf16.gmra.mrb[0].mxu0 %v1057
        %v1093 = vpop.f32.mrb[0].mxu0
        %v1094 = vadd.f32 0.0, %v1093
        %v1095 = vpop.f32.mrb[0].mxu0
        %v1096 = vpop.f32.mrb[0].mxu0
        %v1097 = vadd.f32 0.0, %v1096
        %v1098 = vpop.f32.mrb[0].mxu0
        %1099 = vdwg.mxu0
        %v1100 = vadd.f32 %v998, %v1094
        %v1101 = vadd.f32 %v999, %v1097
        %v1103 = vsel %vm225, %v1019, 0
        %1105 = vmatprep.subr.bf16.mxu0 0
        %1106 = vmatpush1.bf16.msra.mxu0 %v1044
        %1107 = vmatprep.subr.bf16.mxu0 0
        %1108 = vmatpush1.bf16.msra.mxu0 %v1045
        %1109 = vmatprep.subr.bf16.mxu0 0
        %1110 = vmatpush1.bf16.msra.mxu0 %v1046
        %1111 = vmatprep.subr.bf16.mxu0 0
        %1112 = vmatpush1.bf16.msra.mxu0 %v1047
        %1113 = vmatprep.subr.bf16.mxu0 0
        %1114 = vmatpush1.bf16.msra.mxu0 %v1048
        %1115 = vmatprep.subr.bf16.mxu0 0
        %1116 = vmatpush1.bf16.msra.mxu0 %v1049
        %1117 = vmatprep.subr.bf16.mxu0 0
        %1118 = vmatpush1.bf16.msra.mxu0 0
        %1119 = vmatprep.subr.bf16.mxu0 0
        %1120 = vmatpush1.bf16.msra.mxu0 0
        %1121 = vmatprep.subr.bf16.mxu0 0
        %1122 = vmatpush1.bf16.msra.mxu0 0
        %1123 = vmatprep.subr.bf16.mxu0 0
        %1124 = vmatpush1.bf16.msra.mxu0 0
        %1125 = vmatprep.subr.bf16.mxu0 0
        %1126 = vmatpush1.bf16.msra.mxu0 0
        %1127 = vmatprep.subr.bf16.mxu0 0
        %1128 = vmatpush1.bf16.msra.mxu0 0
        %1129 = vmatprep.subr.bf16.mxu0 0
        %1130 = vmatpush1.bf16.msra.mxu0 0
        %1131 = vmatprep.subr.bf16.mxu0 0
        %1132 = vmatpush1.bf16.msra.mxu0 0
        %1133 = vmatprep.subr.bf16.mxu0 0
        %1134 = vmatpush1.bf16.msra.mxu0 0
        %1135 = vmatprep.subr.bf16.mxu0 0
        %1136 = vmatpush1.bf16.msra.mxu0 0
        %1137 = vmatprep.mubr.bf16.mxu0 0
        %1138 = vmatmul.mubr.bf16.gmra.mrb[0].mxu0 %v1103
        %v1139 = vpop.f32.mrb[0].mxu0
        %v1140 = vadd.f32 0.0, %v1139
        %v1141 = vpop.f32.mrb[0].mxu0
        %v1142 = vpop.f32.mrb[0].mxu0
        %v1143 = vadd.f32 0.0, %v1142
        %v1144 = vpop.f32.mrb[0].mxu0
        %1145 = vdwg.mxu0
        %v1146 = vadd.f32 %v1100, %v1140
        %v1147 = vadd.f32 %v1101, %v1143
        %v1148 = vld [vmem:[#allocation2 + $0x190] sm:$0xf]
        %v1149 = vld [vmem:[#allocation2 + $0x194] sm:$0xf]
        %v1150 = vld [vmem:[#allocation2 + $0x198] sm:$0xf]
        %v1151 = vld [vmem:[#allocation2 + $0x19c] sm:$0xf]
        %v1152 = vld [vmem:[#allocation2 + $0x1a0] sm:$0xf]
        %v1153 = vld [vmem:[#allocation2 + $0x1a4] sm:$0xf]
        %v1154 = vld [vmem:[#allocation2 + $0x1a8] sm:$0xf]
        %v1155 = vld [vmem:[#allocation2 + $0x1ac] sm:$0xf]
        %v1156 = vmul.f32 %v181, %v447
        %v1157 = vmul.f32 %v183, %v451
        %v1158 = vpack.c.bf16 %v1157, %v1156
        %v1159 = vunpack.c.l.bf16 %v1158
        %v1160 = vunpack.c.h.bf16 %v1158
        %v1161 = vsub.f32 %v1156, %v1159
        %v1162 = vsub.f32 %v1157, %v1160
        %v1163 = vpack.c.bf16 %v1162, %v1161
        %v1172 = vunpack.c.l.b16 %v1148
        %v1173 = vunpack.c.l.b16 %v1149
        %v1174 = vunpack.c.l.b16 %v1150
        %v1175 = vunpack.c.l.b16 %v1151
        %v1176 = vunpack.c.l.b16 %v1152
        %v1177 = vunpack.c.l.b16 %v1153
        %v1178 = vunpack.c.l.b16 %v1154
        %v1179 = vunpack.c.l.b16 %v1155
        %v1180 = vpack.c.b16 %v1173, %v1172
        %v1181 = vpack.c.b16 %v1175, %v1174
        %v1182 = vpack.c.b16 %v1177, %v1176
        %v1183 = vpack.c.b16 %v1179, %v1178
        %v1189 = vsel %vm452, %v1158, 0
        %1191 = vmatprep.subr.bf16.mxu0 0
        %1192 = vmatpush1.bf16.msra.mxu0 %v1180
        %1193 = vmatprep.subr.bf16.mxu0 0
        %1194 = vmatpush1.bf16.msra.mxu0 %v1181
        %1195 = vmatprep.subr.bf16.mxu0 0
        %1196 = vmatpush1.bf16.msra.mxu0 %v1182
        %1197 = vmatprep.subr.bf16.mxu0 0
        %1198 = vmatpush1.bf16.msra.mxu0 %v1183
        %1199 = vmatprep.subr.bf16.mxu0 0
        %1200 = vmatpush1.bf16.msra.mxu0 0
        %1201 = vmatprep.subr.bf16.mxu0 0
        %1202 = vmatpush1.bf16.msra.mxu0 0
        %1203 = vmatprep.subr.bf16.mxu0 0
        %1204 = vmatpush1.bf16.msra.mxu0 0
        %1205 = vmatprep.subr.bf16.mxu0 0
        %1206 = vmatpush1.bf16.msra.mxu0 0
        %1207 = vmatprep.subr.bf16.mxu0 0
        %1208 = vmatpush1.bf16.msra.mxu0 0
        %1209 = vmatprep.subr.bf16.mxu0 0
        %1210 = vmatpush1.bf16.msra.mxu0 0
        %1211 = vmatprep.subr.bf16.mxu0 0
        %1212 = vmatpush1.bf16.msra.mxu0 0
        %1213 = vmatprep.subr.bf16.mxu0 0
        %1214 = vmatpush1.bf16.msra.mxu0 0
        %1215 = vmatprep.subr.bf16.mxu0 0
        %1216 = vmatpush1.bf16.msra.mxu0 0
        %1217 = vmatprep.subr.bf16.mxu0 0
        %1218 = vmatpush1.bf16.msra.mxu0 0
        %1219 = vmatprep.subr.bf16.mxu0 0
        %1220 = vmatpush1.bf16.msra.mxu0 0
        %1221 = vmatprep.subr.bf16.mxu0 0
        %1222 = vmatpush1.bf16.msra.mxu0 0
        %1223 = vmatprep.mubr.bf16.mxu0 0
        %1224 = vmatmul.mubr.bf16.gmra.mrb[0].mxu0 %v1189
        %v1225 = vpop.f32.mrb[0].mxu0
        %v1226 = vadd.f32 0.0, %v1225
        %v1227 = vpop.f32.mrb[0].mxu0
        %v1228 = vpop.f32.mrb[0].mxu0
        %v1229 = vadd.f32 0.0, %v1228
        %v1230 = vpop.f32.mrb[0].mxu0
        %1231 = vdwg.mxu0
        %v1232 = vadd.f32 %v1146, %v1226
        %v1233 = vadd.f32 %v1147, %v1229
        %v1235 = vsel %vm452, %v1163, 0
        %1237 = vmatprep.subr.bf16.mxu0 0
        %1238 = vmatpush1.bf16.msra.mxu0 %v1180
        %1239 = vmatprep.subr.bf16.mxu0 0
        %1240 = vmatpush1.bf16.msra.mxu0 %v1181
        %1241 = vmatprep.subr.bf16.mxu0 0
        %1242 = vmatpush1.bf16.msra.mxu0 %v1182
        %1243 = vmatprep.subr.bf16.mxu0 0
        %1244 = vmatpush1.bf16.msra.mxu0 %v1183
        %1245 = vmatprep.subr.bf16.mxu0 0
        %1246 = vmatpush1.bf16.msra.mxu0 0
        %1247 = vmatprep.subr.bf16.mxu0 0
        %1248 = vmatpush1.bf16.msra.mxu0 0
        %1249 = vmatprep.subr.bf16.mxu0 0
        %1250 = vmatpush1.bf16.msra.mxu0 0
        %1251 = vmatprep.subr.bf16.mxu0 0
        %1252 = vmatpush1.bf16.msra.mxu0 0
        %1253 = vmatprep.subr.bf16.mxu0 0
        %1254 = vmatpush1.bf16.msra.mxu0 0
        %1255 = vmatprep.subr.bf16.mxu0 0
        %1256 = vmatpush1.bf16.msra.mxu0 0
        %1257 = vmatprep.subr.bf16.mxu0 0
        %1258 = vmatpush1.bf16.msra.mxu0 0
        %1259 = vmatprep.subr.bf16.mxu0 0
        %1260 = vmatpush1.bf16.msra.mxu0 0
        %1261 = vmatprep.subr.bf16.mxu0 0
        %1262 = vmatpush1.bf16.msra.mxu0 0
        %1263 = vmatprep.subr.bf16.mxu0 0
        %1264 = vmatpush1.bf16.msra.mxu0 0
        %1265 = vmatprep.subr.bf16.mxu0 0
        %1266 = vmatpush1.bf16.msra.mxu0 0
        %1267 = vmatprep.subr.bf16.mxu0 0
        %1268 = vmatpush1.bf16.msra.mxu0 0
        %1269 = vmatprep.mubr.bf16.mxu0 0
        %1270 = vmatmul.mubr.bf16.gmra.mrb[0].mxu0 %v1235
        %v1271 = vpop.f32.mrb[0].mxu0
        %v1272 = vadd.f32 0.0, %v1271
        %v1273 = vpop.f32.mrb[0].mxu0
        %v1274 = vpop.f32.mrb[0].mxu0
        %v1275 = vadd.f32 0.0, %v1274
        %v1276 = vpop.f32.mrb[0].mxu0
        %1277 = vdwg.mxu0
        %v1278 = vadd.f32 %v1232, %v1272
        %v1279 = vadd.f32 %v1233, %v1275
        %v1280 = vld [vmem:[#allocation2 + $0x1b0] sm:$0xf]
        %v1281 = vld [vmem:[#allocation2 + $0x1b4] sm:$0xf]
        %v1282 = vld [vmem:[#allocation2 + $0x1b8] sm:$0xf]
        %v1283 = vld [vmem:[#allocation2 + $0x1bc] sm:$0xf]
        %v1284 = vmul.f32 %v181, %v662
        %v1285 = vmul.f32 %v183, %v666
        %v1286 = vpack.c.bf16 %v1285, %v1284
        %v1287 = vunpack.c.l.bf16 %v1286
        %v1288 = vunpack.c.h.bf16 %v1286
        %v1289 = vsub.f32 %v1284, %v1287
        %v1290 = vsub.f32 %v1285, %v1288
        %v1291 = vpack.c.bf16 %v1290, %v1289
        %v1296 = vunpack.c.l.b16 %v1280
        %v1297 = vunpack.c.l.b16 %v1281
        %v1298 = vunpack.c.l.b16 %v1282
        %v1299 = vunpack.c.l.b16 %v1283
        %v1300 = vpack.c.b16 %v1297, %v1296
        %v1301 = vpack.c.b16 %v1299, %v1298
        %v1305 = vsel %vm667, %v1286, 0
        %1307 = vmatprep.subr.bf16.mxu0 0
        %1308 = vmatpush1.bf16.msra.mxu0 %v1300
        %1309 = vmatprep.subr.bf16.mxu0 0
        %1310 = vmatpush1.bf16.msra.mxu0 %v1301
        %1311 = vmatprep.subr.bf16.mxu0 0
        %1312 = vmatpush1.bf16.msra.mxu0 0
        %1313 = vmatprep.subr.bf16.mxu0 0
        %1314 = vmatpush1.bf16.msra.mxu0 0
        %1315 = vmatprep.subr.bf16.mxu0 0
        %1316 = vmatpush1.bf16.msra.mxu0 0
        %1317 = vmatprep.subr.bf16.mxu0 0
        %1318 = vmatpush1.bf16.msra.mxu0 0
        %1319 = vmatprep.subr.bf16.mxu0 0
        %1320 = vmatpush1.bf16.msra.mxu0 0
        %1321 = vmatprep.subr.bf16.mxu0 0
        %1322 = vmatpush1.bf16.msra.mxu0 0
        %1323 = vmatprep.subr.bf16.mxu0 0
        %1324 = vmatpush1.bf16.msra.mxu0 0
        %1325 = vmatprep.subr.bf16.mxu0 0
        %1326 = vmatpush1.bf16.msra.mxu0 0
        %1327 = vmatprep.subr.bf16.mxu0 0
        %1328 = vmatpush1.bf16.msra.mxu0 0
        %1329 = vmatprep.subr.bf16.mxu0 0
        %1330 = vmatpush1.bf16.msra.mxu0 0
        %1331 = vmatprep.subr.bf16.mxu0 0
        %1332 = vmatpush1.bf16.msra.mxu0 0
        %1333 = vmatprep.subr.bf16.mxu0 0
        %1334 = vmatpush1.bf16.msra.mxu0 0
        %1335 = vmatprep.subr.bf16.mxu0 0
        %1336 = vmatpush1.bf16.msra.mxu0 0
        %1337 = vmatprep.subr.bf16.mxu0 0
        %1338 = vmatpush1.bf16.msra.mxu0 0
        %1339 = vmatprep.mubr.bf16.mxu0 0
        %1340 = vmatmul.mubr.bf16.gmra.mrb[0].mxu0 %v1305
        %v1341 = vpop.f32.mrb[0].mxu0
        %v1342 = vadd.f32 0.0, %v1341
        %v1343 = vpop.f32.mrb[0].mxu0
        %v1344 = vpop.f32.mrb[0].mxu0
        %v1345 = vadd.f32 0.0, %v1344
        %v1346 = vpop.f32.mrb[0].mxu0
        %1347 = vdwg.mxu0
        %v1348 = vadd.f32 %v1278, %v1342
        %v1349 = vadd.f32 %v1279, %v1345
        %v1351 = vsel %vm667, %v1291, 0
        %1353 = vmatprep.subr.bf16.mxu0 0
        %1354 = vmatpush1.bf16.msra.mxu0 %v1300
        %1355 = vmatprep.subr.bf16.mxu0 0
        %1356 = vmatpush1.bf16.msra.mxu0 %v1301
        %1357 = vmatprep.subr.bf16.mxu0 0
        %1358 = vmatpush1.bf16.msra.mxu0 0
        %1359 = vmatprep.subr.bf16.mxu0 0
        %1360 = vmatpush1.bf16.msra.mxu0 0
        %1361 = vmatprep.subr.bf16.mxu0 0
        %1362 = vmatpush1.bf16.msra.mxu0 0
        %1363 = vmatprep.subr.bf16.mxu0 0
        %1364 = vmatpush1.bf16.msra.mxu0 0
        %1365 = vmatprep.subr.bf16.mxu0 0
        %1366 = vmatpush1.bf16.msra.mxu0 0
        %1367 = vmatprep.subr.bf16.mxu0 0
        %1368 = vmatpush1.bf16.msra.mxu0 0
        %1369 = vmatprep.subr.bf16.mxu0 0
        %1370 = vmatpush1.bf16.msra.mxu0 0
        %1371 = vmatprep.subr.bf16.mxu0 0
        %1372 = vmatpush1.bf16.msra.mxu0 0
        %1373 = vmatprep.subr.bf16.mxu0 0
        %1374 = vmatpush1.bf16.msra.mxu0 0
        %1375 = vmatprep.subr.bf16.mxu0 0
        %1376 = vmatpush1.bf16.msra.mxu0 0
        %1377 = vmatprep.subr.bf16.mxu0 0
        %1378 = vmatpush1.bf16.msra.mxu0 0
        %1379 = vmatprep.subr.bf16.mxu0 0
        %1380 = vmatpush1.bf16.msra.mxu0 0
        %1381 = vmatprep.subr.bf16.mxu0 0
        %1382 = vmatpush1.bf16.msra.mxu0 0
        %1383 = vmatprep.subr.bf16.mxu0 0
        %1384 = vmatpush1.bf16.msra.mxu0 0
        %1385 = vmatprep.mubr.bf16.mxu0 0
        %1386 = vmatmul.mubr.bf16.gmra.mrb[0].mxu0 %v1351
        %v1387 = vpop.f32.mrb[0].mxu0
        %v1388 = vadd.f32 0.0, %v1387
        %v1389 = vpop.f32.mrb[0].mxu0
        %v1390 = vpop.f32.mrb[0].mxu0
        %v1391 = vadd.f32 0.0, %v1390
        %v1392 = vpop.f32.mrb[0].mxu0
        %1393 = vdwg.mxu0
        %v1394 = vadd.f32 %v1348, %v1388
        %v1395 = vadd.f32 %v1349, %v1391
        %1396 = vst [vmem:[%s177] sm:$0xff] %v1394
        %1397 = vst [vmem:[%s177 + $0x8] sm:$0xff] %v1395
        %s1398 = sand.u32 %s75, 1
        %s1399 = scalar_lea.sflag [#allocation4], %s1398
        %s1400 = sand.u32 %s75, 1
        %s1401 = smul.addr %s1400, 16
        %s1402 = scalar_lea.vmem [#allocation7], %s1401
        // Predicated region
        $region37: #{tpu_custom_call.1} parent=27 // pred_check
          %p1403 = pneg %p85
        $region38: #{tpu_custom_call.1} parent=27 // pred_check_branch
          %1405 = sbr.rel (%p1403) target = $region40
        $region39: #{tpu_custom_call.1} parent=27 // pred_region
          %s1406 = smul.u32 2, %s20
          %s1408 = ssub.s32 256, 256
          %1409 = vsyncadd %s1399, %s1408
          %s1410 = smul.addr %s1406, 128
          %s1411 = scalar_lea.hbm %s2, %s1410
          %s1412 = sshll.u32 %s1402, 4
          %s1413 = int_to_ptr.vmem [resolvable:$true] %s1412
          %1418 = dma.vmem_to_hbm [thread:$0]  %s1413, 256, %s1411, %s1399, 128, 128, 8
        $region40: #{tpu_custom_call.1} parent=27 // pred_fallthru
          _
      $region28: #{tpu_custom_call.1} parent=5 // pred_fallthru
        _
      %p1419 = scmp.le.s32.totalorder 2, %s15
      // Predicated region
      $region41: #{tpu_custom_call.1} parent=5 // pred_check
        %p1420 = pneg %p1419
      $region42: #{tpu_custom_call.1} parent=5 // pred_check_branch
        %1422 = sbr.rel (%p1420) target = $region44
      $region43: #{tpu_custom_call.1} parent=5 // pred_region
        %s1423 = ssub.s32 %s15, 2
        // Predicated region
        $region45: #{tpu_custom_call.1} parent=43 // pred_check
          %p1424 = pneg %p91
        $region46: #{tpu_custom_call.1} parent=43 // pred_check_branch
          %1426 = sbr.rel (%p1424) target = $region48
        $region47: #{tpu_custom_call.1} parent=43 // pred_region
          %s1427 = sand.u32 %s76, 1
          %s1428 = scalar_lea.sflag [#allocation4], %s1427
          %s1429 = sand.u32 %s76, 1
          %s1430 = smul.addr %s1429, 16
          %s1431 = scalar_lea.vmem [#allocation7], %s1430
          %1432 = dma.done %s1428, 256
        $region48: #{tpu_custom_call.1} parent=43 // pred_fallthru
          _
      $region44: #{tpu_custom_call.1} parent=5 // pred_fallthru
        _
    $region6: #{tpu_custom_call.1} parent=1 // loop_footer
      %s19 = sadd.s32 1, %s15
    $region7: #{tpu_custom_call.1} parent=1 // loop_footer_branch
      %14 = sbr.rel target = $region3
    $region8: #{tpu_custom_call.1} parent=1 // loop_exit
      _
    %1433 = vsyncpa [#allocation3], 1
    %s1434 = scalar_lea.sflag [#allocation3], 1
    %1435 = vsyncpa %s1434, 1
    %1436 = vsyncpa [#allocation6], 1
    %s1437 = scalar_lea.sflag [#allocation6], 1
    %1438 = vsyncpa %s1437, 1
    %1439 = vsyncpa [#allocation4], 1
    %s1440 = scalar_lea.sflag [#allocation4], 1
    %1441 = vsyncpa %s1440, 1

</llo_original>
